<compile_context>
chip_gen: v6e
topology: v6e:2x2x1
jax: 0.10.0
libtpu: 0.0.40
codegen_flags: <defaults>
</compile_context>

<pallas_src>
import jax
import jax.numpy as jnp
from jax.experimental import pallas as pl
from jax.experimental.pallas import tpu as pltpu


# --------------------------------------------------------------------------- #
# Stage 1: attention fold + LSTM recurrence                                   #
# --------------------------------------------------------------------------- #
def _recurrence_kernel(
    # inputs
    x_ref,        # (T_dec*B, H) bf16  relu(emb[tokens])
    h0_ref,       # (B, H)  f32  hidden[0] (layer 0)
    c0_ref,       # (B, H)  f32  hidden[1] (layer 0)
    encsum_ref,   # (B, 2H) bf16 sum_t enc_seq[t]
    wattn_ref,    # (2H, H) bf16 lin_attn weight, pre-transposed
    battn_ref,    # (1, H)  f32  T_enc * lin_attn bias
    wih_ref,      # (H, 4H) bf16 LSTM weight_ih_l0, pre-transposed
    bgate_ref,    # (1, 4H) f32  b_ih + b_hh
    whh_ref,      # (H, 4H) bf16 LSTM weight_hh_l0, pre-transposed
    # outputs
    hs_ref,       # (T_dec*B, H) bf16 stacked LSTM hidden states
    hT_ref,       # (B, H) f32 final hidden
    cT_ref,       # (B, H) f32 final cell
):
    B, H = h0_ref.shape
    TB = x_ref.shape[0]
    T_dec = TB // B

    # Attention context (algebraically folded; one (B,2H)@(2H,H) matmul):
    #   ctx = h0 * (W_attn @ sum_t enc_t + T_enc * b_attn)
    ctx = jnp.dot(encsum_ref[...], wattn_ref[...],
                  preferred_element_type=jnp.float32) + battn_ref[...]   # (B, H)
    h = h0_ref[...] * ctx
    c = c0_ref[...]

    # Hoisted input-to-hidden projection for all timesteps, register-resident
    # ((TB,4H) f32 is only a handful of vregs at these sizes -> no VMEM trip).
    gx = jnp.dot(x_ref[...], wih_ref[...],
                 preferred_element_type=jnp.float32) + bgate_ref[...]    # (TB, 4H)

    whh = whh_ref[...]                                                   # (H, 4H)

    # LSTM recurrence (PyTorch gate order i, f, g, o).  T_dec is a static
    # Python int, so this loop fully unrolls with static slices; h/c stay in
    # registers; only the per-step hidden state is stored (bf16) for stage 2.
    for t in range(T_dec):
        gates = gx[t * B:(t + 1) * B, :] + jnp.dot(
            h.astype(jnp.bfloat16), whh, preferred_element_type=jnp.float32)
        act = jax.nn.sigmoid(gates)           # full (B,4H) tile: one EUP pass
        i_g = act[:, 0:H]
        f_g = act[:, H:2 * H]
        o_g = act[:, 3 * H:4 * H]
        g_g = jnp.tanh(gates[:, 2 * H:3 * H])
        c = f_g * c + i_g * g_g
        h = o_g * jnp.tanh(c)
        hs_ref[t * B:(t + 1) * B, :] = h.astype(hs_ref.dtype)
        # TODO(synk): pltpu.roll-based gate alignment (full-vreg tanh too)
        # could replace the 32-lane slices if the recurrence dominates.

    hT_ref[...] = h
    cT_ref[...] = c


# --------------------------------------------------------------------------- #
# Stage 2: output projection + online log-sum-exp (gridded)                    #
# --------------------------------------------------------------------------- #
def _logits_lse_kernel(hs_ref, wout_ref, bout_ref, logits_ref, lse_ref,
                       m_scr, l_scr):
    v = pl.program_id(1)

    @pl.when(v == 0)
    def _():
        m_scr[...] = jnp.full(m_scr.shape, -jnp.inf, m_scr.dtype)
        l_scr[...] = jnp.zeros(l_scr.shape, l_scr.dtype)

    logits = jnp.dot(hs_ref[...], wout_ref[...],
                     preferred_element_type=jnp.float32) + bout_ref[...]  # (tm,tn)
    logits_ref[...] = logits

    m_prev = m_scr[...]
    m_new = jnp.maximum(m_prev, jnp.max(logits, axis=-1, keepdims=True))
    l_scr[...] = (l_scr[...] * jnp.exp(m_prev - m_new)
                  + jnp.sum(jnp.exp(logits - m_new), axis=-1, keepdims=True))
    m_scr[...] = m_new

    @pl.when(v == pl.num_programs(1) - 1)
    def _():
        lse_ref[...] = m_scr[...] + jnp.log(l_scr[...])


# --------------------------------------------------------------------------- #
# Wrapper                                                                      #
# --------------------------------------------------------------------------- #
def _divisor_tile(n, candidates):
    for c in candidates:
        if c <= n and n % c == 0:
            return c
    return n


def _vmem_limit(nbytes):
    # double-buffer headroom + slack, clamped to a v7x-safe ceiling.
    return int(min(max(2 * nbytes + (1 << 20), 4 << 20), 32 << 20))


@jax.jit
def decoder_lstm_forward(tokens, hidden, enc_seq, params):
    """Pallas implementation of DecoderLSTM.forward (layers=1, eval mode)."""
    T_dec, B = tokens.shape
    T_enc = enc_seq.shape[0]
    V, H = params["emb"].shape
    h0, c0 = hidden
    TB = T_dec * B
    Vp = ((V + 127) // 128) * 128          # lane-dense (multiple of 128) vocab
    bf16 = jnp.bfloat16

    # Embedding gather + ReLU in XLA (dropout = identity in eval mode);
    # activations are shipped to the kernel in bf16 (half the DMA traffic).
    x2d = jnp.maximum(params["emb"][tokens.astype(jnp.int32)], 0.0)
    x2d = x2d.reshape(TB, H).astype(bf16)

    # Attention: reduce encoder sequence over time here; fold T_enc into bias.
    enc_sum = jnp.sum(enc_seq, axis=0).astype(bf16)                   # (B, 2H)
    battn_eff = (params["b_attn"] * T_enc).reshape(1, H).astype(jnp.float32)

    # Fold the two LSTM biases; pre-transpose every weight to (K, N) layout.
    bgate = (params["b_ih"] + params["b_hh"]).reshape(1, 4 * H).astype(jnp.float32)
    wattn_t = params["w_attn"].T.astype(bf16)                         # (2H, H)
    wih_t = params["w_ih"].T.astype(bf16)                             # (H, 4H)
    whh_t = params["w_hh"].T.astype(bf16)                             # (H, 4H)

    # Pad vocab dim: zero weight columns, -1e30 bias so padded logits vanish
    # under log-softmax; sliced off after the kernel.
    wout_t = jnp.zeros((H, Vp), jnp.float32).at[:, :V].set(params["w_out"].T)
    wout_t = wout_t.astype(bf16)
    bout_p = jnp.full((1, Vp), -1e30, jnp.float32).at[0, :V].set(params["b_out"])

    vmem = pl.BlockSpec(memory_space=pltpu.MemorySpace.VMEM)

    # ---- Stage 1: attention + recurrence (single invocation) --------------
    rec_args = (x2d, h0[0].astype(jnp.float32), c0[0].astype(jnp.float32),
                enc_sum, wattn_t, battn_eff, wih_t, bgate, whh_t)
    rec_bytes = sum(int(a.size) * a.dtype.itemsize for a in rec_args) \
        + TB * H * 2 + 2 * B * H * 4
    hs, hT, cT = pl.pallas_call(
        _recurrence_kernel,
        out_shape=(
            jax.ShapeDtypeStruct((TB, H), bf16),
            jax.ShapeDtypeStruct((B, H), jnp.float32),
            jax.ShapeDtypeStruct((B, H), jnp.float32),
        ),
        in_specs=[vmem] * len(rec_args),
        out_specs=(vmem, vmem, vmem),
        compiler_params=pltpu.CompilerParams(
            vmem_limit_bytes=_vmem_limit(rec_bytes)),
    )(*rec_args)

    # ---- Stage 2: output projection + log-sum-exp, gridded -----------------
    # Rows are "parallel" (v7x: both TensorCores), vocab is the "arbitrary"
    # reduction axis; logits blocks stream to HBM, only (tm,1) LSE scratch
    # stays resident.
    tm = _divisor_tile(TB, (256, 128, 64, 32, 16, 8))
    tn = _divisor_tile(Vp, (512, 256, 128))
    blk_bytes = tm * H * 2 + H * tn * 2 + tn * 4 + tm * tn * 4 + tm * 4
    logits, lse = pl.pallas_call(
        _logits_lse_kernel,
        out_shape=(
            jax.ShapeDtypeStruct((TB, Vp), jnp.float32),
            jax.ShapeDtypeStruct((TB, 1), jnp.float32),
        ),
        grid_spec=pltpu.PrefetchScalarGridSpec(
            num_scalar_prefetch=0,
            grid=(TB // tm, Vp // tn),
            in_specs=[
                pl.BlockSpec((tm, H), lambda r, v: (r, 0)),
                pl.BlockSpec((H, tn), lambda r, v: (0, v)),
                pl.BlockSpec((1, tn), lambda r, v: (0, v)),
            ],
            out_specs=[
                pl.BlockSpec((tm, tn), lambda r, v: (r, v)),
                pl.BlockSpec((tm, 1), lambda r, v: (r, 0)),
            ],
            scratch_shapes=[pltpu.VMEM((tm, 1), jnp.float32),
                            pltpu.VMEM((tm, 1), jnp.float32)],
        ),
        compiler_params=pltpu.CompilerParams(
            dimension_semantics=("parallel", "arbitrary"),
            vmem_limit_bytes=_vmem_limit(2 * blk_bytes)),
    )(hs, wout_t, bout_p)

    # log_softmax = logits - lse; padded vocab columns are sliced off before
    # any further use (the -1e30 padded slab must not be reused downstream).
    logp = (logits[:, :V] - lse).reshape(T_dec, B, V)
    return logp, (hT[None, :, :], cT[None, :, :])


# --------------------------------------------------------------------------- #
# Pure-JAX reference + test harness                                            #
# --------------------------------------------------------------------------- #
def reference_forward(tokens, hidden, enc_seq, p):
    """Pure-JAX reference mirroring the PyTorch module (eval mode)."""
    hp = jax.lax.Precision.HIGHEST
    h0, c0 = hidden
    H = p["emb"].shape[1]
    x = jnp.maximum(p["emb"][tokens], 0.0)                            # (T, B, H)
    htl = jnp.einsum("tbk,hk->tbh", enc_seq, p["w_attn"], precision=hp) + p["b_attn"]
    ctx = h0[0] * jnp.sum(htl, axis=0)                                # (B, H)
    h, c = ctx, c0[0]
    outs = []
    for t in range(x.shape[0]):
        g = (jnp.dot(x[t], p["w_ih"].T, precision=hp) + p["b_ih"]
             + jnp.dot(h, p["w_hh"].T, precision=hp) + p["b_hh"])
        i = jax.nn.sigmoid(g[:, 0:H])
        f = jax.nn.sigmoid(g[:, H:2 * H])
        gg = jnp.tanh(g[:, 2 * H:3 * H])
        o = jax.nn.sigmoid(g[:, 3 * H:4 * H])
        c = f * c + i * gg
        h = o * jnp.tanh(c)
        outs.append(h)
    out = jnp.stack(outs)                                             # (T, B, H)
    logits = jnp.einsum("tbh,vh->tbv", out, p["w_out"], precision=hp) + p["b_out"]
    return jax.nn.log_softmax(logits, axis=2), (h[None], c[None])


def init_params(key, hidden_size, output_size):
    H, V = hidden_size, output_size
    k = iter(jax.random.split(key, 16))
    u = lambda kk, shape, bound: jax.random.uniform(
        kk, shape, jnp.float32, -bound, bound)
    kH = 1.0 / jnp.sqrt(H)
    k2H = 1.0 / jnp.sqrt(2 * H)
    return {
        "emb":    jax.random.normal(next(k), (V, H), jnp.float32),
        "w_attn": u(next(k), (H, 2 * H), k2H),
        "b_attn": u(next(k), (H,), k2H),
        "w_ih":   u(next(k), (4 * H, H), kH),
        "b_ih":   u(next(k), (4 * H,), kH),
        "w_hh":   u(next(k), (4 * H, H), kH),
        "b_hh":   u(next(k), (4 * H,), kH),
        "w_out":  u(next(k), (V, H), kH),
        "b_out":  u(next(k), (V,), kH),
    }


if __name__ == "__main__":
    H = 32        # hidden_size
    V = 64        # output_size (vocab)
    L = 1         # layers (kernel implements the layers=1 case)
    B = 8         # batch
    T_DEC = 8     # decoder sequence length
    T_ENC = 8     # encoder sequence length

    root = jax.random.PRNGKey(0)
    kp, kt, kh, kc, ke = jax.random.split(root, 5)

    params = init_params(kp, H, V)
    tokens = jax.random.randint(kt, (T_DEC, B), 0, V, dtype=jnp.int32)
    h0 = jax.random.normal(kh, (L, B, H), jnp.float32)
    c0 = jax.random.normal(kc, (L, B, H), jnp.float32)
    enc_seq = jax.random.normal(ke, (T_ENC, B, 2 * H), jnp.float32)

    logp, (hT, cT) = decoder_lstm_forward(tokens, (h0, c0), enc_seq, params)
    jax.block_until_ready((logp, hT, cT))

    ref_logp, (ref_hT, ref_cT) = reference_forward(
        tokens, (h0, c0), enc_seq, params)
    assert logp.shape == (T_DEC, B, V)
    assert hT.shape == (L, B, H) and cT.shape == (L, B, H)
    assert jnp.allclose(logp, ref_logp, atol=2e-2, rtol=2e-2)
    assert jnp.allclose(hT, ref_hT, atol=2e-2, rtol=2e-2)
    assert jnp.allclose(cT, ref_cT, atol=2e-2, rtol=2e-2)

    print("KERNEL_OK")
</pallas_src>

<mosaic_0001>
module attributes {stable_mosaic.version = 11 : i64} {
  func.func @_logits_lse_kernel(%arg0: i32, %arg1: i32, %arg2: memref<64x32xbf16, #tpu.memory_space<vmem>>, %arg3: memref<32x128xbf16, #tpu.memory_space<vmem>>, %arg4: memref<1x128xf32, #tpu.memory_space<vmem>>, %arg5: memref<64x128xf32, #tpu.memory_space<vmem>>, %arg6: memref<64x1xf32, #tpu.memory_space<vmem>>, %arg7: memref<64x1xf32, #tpu.memory_space<vmem>>, %arg8: memref<64x1xf32, #tpu.memory_space<vmem>>) attributes {dimension_semantics = [#tpu.dimension_semantics<parallel>, #tpu.dimension_semantics<arbitrary>], iteration_bounds = array<i64: 1, 1>, scalar_prefetch = 0 : i64, scratch_operands = 2 : i64, tpu.core_type = #tpu.core_type<tc>, window_params = [{transform_indices = @transform_0, window_bounds = array<i64: 64, 32>}, {transform_indices = @transform_1, window_bounds = array<i64: 32, 128>}, {transform_indices = @transform_2, window_bounds = array<i64: 1, 128>}, {transform_indices = @transform_3, window_bounds = array<i64: 64, 128>}, {transform_indices = @transform_4, window_bounds = array<i64: 64, 1>}]} {
    %c0_i32 = arith.constant 0 : i32
    %0 = arith.cmpi eq, %arg1, %c0_i32 : i32
    %1 = arith.extui %0 : i1 to i32
    %c0_i32_0 = arith.constant 0 : i32
    %2 = arith.cmpi ne, %1, %c0_i32_0 : i32
    scf.if %2 {
      %cst_20 = arith.constant 0xFF800000 : f32
      %29 = vector.broadcast %cst_20 : f32 to vector<64x1xf32>
      %c0_21 = arith.constant 0 : index
      %c0_22 = arith.constant 0 : index
      %30 = vector.load %arg7[%c0_21, %c0_22] : memref<64x1xf32, #tpu.memory_space<vmem>>, vector<64x1xf32>
      tpu.vector_store %arg7[%c0_21, %c0_22], %29 {strides = array<i32>} : memref<64x1xf32, #tpu.memory_space<vmem>>, vector<64x1xf32>,
      %cst_23 = arith.constant 0.000000e+00 : f32
      %31 = vector.broadcast %cst_23 : f32 to vector<64x1xf32>
      %c0_24 = arith.constant 0 : index
      %c0_25 = arith.constant 0 : index
      %32 = vector.load %arg8[%c0_24, %c0_25] : memref<64x1xf32, #tpu.memory_space<vmem>>, vector<64x1xf32>
      tpu.vector_store %arg8[%c0_24, %c0_25], %31 {strides = array<i32>} : memref<64x1xf32, #tpu.memory_space<vmem>>, vector<64x1xf32>,
    } else {
    }
    %c0 = arith.constant 0 : index
    %c0_1 = arith.constant 0 : index
    %3 = vector.load %arg2[%c0, %c0_1] : memref<64x32xbf16, #tpu.memory_space<vmem>>, vector<64x32xbf16>
    %c0_2 = arith.constant 0 : index
    %c0_3 = arith.constant 0 : index
    %4 = vector.load %arg3[%c0_2, %c0_3] : memref<32x128xbf16, #tpu.memory_space<vmem>>, vector<32x128xbf16>
    %cst = arith.constant dense<0.000000e+00> : vector<64x128xf32>
    %5 = tpu.matmul %3, %4, %cst {dimension_numbers = #tpu.dot_dimension_numbers<[1], [0], [0], [1], [0, 0, 1, 1], [], []>} : vector<64x32xbf16>, vector<32x128xbf16>, vector<64x128xf32> -> vector<64x128xf32>
    %c0_4 = arith.constant 0 : index
    %c0_5 = arith.constant 0 : index
    %6 = vector.load %arg4[%c0_4, %c0_5] : memref<1x128xf32, #tpu.memory_space<vmem>>, vector<1x128xf32>
    %7 = vector.broadcast %6 : vector<1x128xf32> to vector<64x128xf32>
    %8 = arith.addf %5, %7 : vector<64x128xf32>
    %c0_6 = arith.constant 0 : index
    %c0_7 = arith.constant 0 : index
    %9 = vector.load %arg5[%c0_6, %c0_7] : memref<64x128xf32, #tpu.memory_space<vmem>>, vector<64x128xf32>
    tpu.vector_store %arg5[%c0_6, %c0_7], %8 {strides = array<i32>} : memref<64x128xf32, #tpu.memory_space<vmem>>, vector<64x128xf32>,
    %c0_8 = arith.constant 0 : index
    %c0_9 = arith.constant 0 : index
    %10 = vector.load %arg7[%c0_8, %c0_9] : memref<64x1xf32, #tpu.memory_space<vmem>>, vector<64x1xf32>
    %cst_10 = arith.constant dense<0xFF800000> : vector<64xf32>
    %11 = vector.multi_reduction <maximumf>, %8, %cst_10 [1] : vector<64x128xf32> to vector<64xf32>
    %12 = vector.shape_cast %11 : vector<64xf32> to vector<64x1xf32>
    %13 = arith.maximumf %10, %12 : vector<64x1xf32>
    %c0_11 = arith.constant 0 : index
    %c0_12 = arith.constant 0 : index
    %14 = vector.load %arg8[%c0_11, %c0_12] : memref<64x1xf32, #tpu.memory_space<vmem>>, vector<64x1xf32>
    %15 = arith.subf %10, %13 : vector<64x1xf32>
    %16 = math.exp %15 : vector<64x1xf32>
    %17 = arith.mulf %14, %16 : vector<64x1xf32>
    %18 = vector.broadcast %13 : vector<64x1xf32> to vector<64x128xf32>
    %19 = arith.subf %8, %18 : vector<64x128xf32>
    %20 = math.exp %19 : vector<64x128xf32>
    %cst_13 = arith.constant dense<0.000000e+00> : vector<64xf32>
    %21 = vector.multi_reduction <add>, %20, %cst_13 [1] : vector<64x128xf32> to vector<64xf32>
    %22 = vector.shape_cast %21 : vector<64xf32> to vector<64x1xf32>
    %23 = arith.addf %17, %22 : vector<64x1xf32>
    %c0_14 = arith.constant 0 : index
    %c0_15 = arith.constant 0 : index
    %24 = vector.load %arg8[%c0_14, %c0_15] : memref<64x1xf32, #tpu.memory_space<vmem>>, vector<64x1xf32>
    tpu.vector_store %arg8[%c0_14, %c0_15], %23 {strides = array<i32>} : memref<64x1xf32, #tpu.memory_space<vmem>>, vector<64x1xf32>,
    %c0_16 = arith.constant 0 : index
    %c0_17 = arith.constant 0 : index
    %25 = vector.load %arg7[%c0_16, %c0_17] : memref<64x1xf32, #tpu.memory_space<vmem>>, vector<64x1xf32>
    tpu.vector_store %arg7[%c0_16, %c0_17], %13 {strides = array<i32>} : memref<64x1xf32, #tpu.memory_space<vmem>>, vector<64x1xf32>,
    %c0_i32_18 = arith.constant 0 : i32
    %26 = arith.cmpi eq, %arg1, %c0_i32_18 : i32
    %27 = arith.extui %26 : i1 to i32
    %c0_i32_19 = arith.constant 0 : i32
    %28 = arith.cmpi ne, %27, %c0_i32_19 : i32
    scf.if %28 {
      %c0_20 = arith.constant 0 : index
      %c0_21 = arith.constant 0 : index
      %29 = vector.load %arg7[%c0_20, %c0_21] : memref<64x1xf32, #tpu.memory_space<vmem>>, vector<64x1xf32>
      %c0_22 = arith.constant 0 : index
      %c0_23 = arith.constant 0 : index
      %30 = vector.load %arg8[%c0_22, %c0_23] : memref<64x1xf32, #tpu.memory_space<vmem>>, vector<64x1xf32>
      %31 = math.log %30 : vector<64x1xf32>
      %32 = arith.addf %29, %31 : vector<64x1xf32>
      %c0_24 = arith.constant 0 : index
      %c0_25 = arith.constant 0 : index
      %33 = vector.load %arg6[%c0_24, %c0_25] : memref<64x1xf32, #tpu.memory_space<vmem>>, vector<64x1xf32>
      tpu.vector_store %arg6[%c0_24, %c0_25], %32 {strides = array<i32>} : memref<64x1xf32, #tpu.memory_space<vmem>>, vector<64x1xf32>,
    } else {
    }
    return
  }
  func.func @transform_0(%arg0: i32, %arg1: i32) -> (i32, i32) {
    %c0_i32 = arith.constant 0 : i32
    %c0_i32_0 = arith.constant 0 : i32
    return %arg0, %c0_i32 : i32, i32
  }
  func.func @transform_1(%arg0: i32, %arg1: i32) -> (i32, i32) {
    %c0_i32 = arith.constant 0 : i32
    %c0_i32_0 = arith.constant 0 : i32
    return %c0_i32, %arg1 : i32, i32
  }
  func.func @transform_2(%arg0: i32, %arg1: i32) -> (i32, i32) {
    %c0_i32 = arith.constant 0 : i32
    %c0_i32_0 = arith.constant 0 : i32
    return %c0_i32, %arg1 : i32, i32
  }
  func.func @transform_3(%arg0: i32, %arg1: i32) -> (i32, i32) {
    %c0_i32 = arith.constant 0 : i32
    return %arg0, %arg1 : i32, i32
  }
  func.func @transform_4(%arg0: i32, %arg1: i32) -> (i32, i32) {
    %c0_i32 = arith.constant 0 : i32
    %c0_i32_0 = arith.constant 0 : i32
    return %arg0, %c0_i32 : i32, i32
  }
}

module attributes {stable_mosaic.version = 11 : i64} {
  func.func @_recurrence_kernel(%arg0: memref<64x32xbf16, #tpu.memory_space<vmem>>, %arg1: memref<8x32xf32, #tpu.memory_space<vmem>>, %arg2: memref<8x32xf32, #tpu.memory_space<vmem>>, %arg3: memref<8x64xbf16, #tpu.memory_space<vmem>>, %arg4: memref<64x32xbf16, #tpu.memory_space<vmem>>, %arg5: memref<1x32xf32, #tpu.memory_space<vmem>>, %arg6: memref<32x128xbf16, #tpu.memory_space<vmem>>, %arg7: memref<1x128xf32, #tpu.memory_space<vmem>>, %arg8: memref<32x128xbf16, #tpu.memory_space<vmem>>, %arg9: memref<64x32xbf16, #tpu.memory_space<vmem>>, %arg10: memref<8x32xf32, #tpu.memory_space<vmem>>, %arg11: memref<8x32xf32, #tpu.memory_space<vmem>>) attributes {dimension_semantics = [], scalar_prefetch = 0 : i64, scratch_operands = 0 : i64, tpu.core_type = #tpu.core_type<tc>} {
    %c0 = arith.constant 0 : index
    %c0_0 = arith.constant 0 : index
    %0 = vector.load %arg3[%c0, %c0_0] : memref<8x64xbf16, #tpu.memory_space<vmem>>, vector<8x64xbf16>
    %c0_1 = arith.constant 0 : index
    %c0_2 = arith.constant 0 : index
    %1 = vector.load %arg4[%c0_1, %c0_2] : memref<64x32xbf16, #tpu.memory_space<vmem>>, vector<64x32xbf16>
    %cst = arith.constant dense<0.000000e+00> : vector<8x32xf32>
    %2 = tpu.matmul %0, %1, %cst {dimension_numbers = #tpu.dot_dimension_numbers<[1], [0], [0], [1], [0, 0, 1, 1], [], []>} : vector<8x64xbf16>, vector<64x32xbf16>, vector<8x32xf32> -> vector<8x32xf32>
    %c0_3 = arith.constant 0 : index
    %c0_4 = arith.constant 0 : index
    %3 = vector.load %arg5[%c0_3, %c0_4] : memref<1x32xf32, #tpu.memory_space<vmem>>, vector<1x32xf32>
    %4 = vector.broadcast %3 : vector<1x32xf32> to vector<8x32xf32>
    %5 = arith.addf %2, %4 : vector<8x32xf32>
    %c0_5 = arith.constant 0 : index
    %c0_6 = arith.constant 0 : index
    %6 = vector.load %arg1[%c0_5, %c0_6] : memref<8x32xf32, #tpu.memory_space<vmem>>, vector<8x32xf32>
    %7 = arith.mulf %6, %5 : vector<8x32xf32>
    %c0_7 = arith.constant 0 : index
    %c0_8 = arith.constant 0 : index
    %8 = vector.load %arg2[%c0_7, %c0_8] : memref<8x32xf32, #tpu.memory_space<vmem>>, vector<8x32xf32>
    %c0_9 = arith.constant 0 : index
    %c0_10 = arith.constant 0 : index
    %9 = vector.load %arg0[%c0_9, %c0_10] : memref<64x32xbf16, #tpu.memory_space<vmem>>, vector<64x32xbf16>
    %c0_11 = arith.constant 0 : index
    %c0_12 = arith.constant 0 : index
    %10 = vector.load %arg6[%c0_11, %c0_12] : memref<32x128xbf16, #tpu.memory_space<vmem>>, vector<32x128xbf16>
    %cst_13 = arith.constant dense<0.000000e+00> : vector<64x128xf32>
    %11 = tpu.matmul %9, %10, %cst_13 {dimension_numbers = #tpu.dot_dimension_numbers<[1], [0], [0], [1], [0, 0, 1, 1], [], []>} : vector<64x32xbf16>, vector<32x128xbf16>, vector<64x128xf32> -> vector<64x128xf32>
    %c0_14 = arith.constant 0 : index
    %c0_15 = arith.constant 0 : index
    %12 = vector.load %arg7[%c0_14, %c0_15] : memref<1x128xf32, #tpu.memory_space<vmem>>, vector<1x128xf32>
    %13 = vector.broadcast %12 : vector<1x128xf32> to vector<64x128xf32>
    %14 = arith.addf %11, %13 : vector<64x128xf32>
    %c0_16 = arith.constant 0 : index
    %c0_17 = arith.constant 0 : index
    %15 = vector.load %arg8[%c0_16, %c0_17] : memref<32x128xbf16, #tpu.memory_space<vmem>>, vector<32x128xbf16>
    %16 = vector.extract_strided_slice %14 {offsets = [0, 0], sizes = [8, 128], strides = [1, 1]} : vector<64x128xf32> to vector<8x128xf32>
    %17 = arith.truncf %7 : vector<8x32xf32> to vector<8x32xbf16>
    %cst_18 = arith.constant dense<0.000000e+00> : vector<8x128xf32>
    %18 = tpu.matmul %17, %15, %cst_18 {dimension_numbers = #tpu.dot_dimension_numbers<[1], [0], [0], [1], [0, 0, 1, 1], [], []>} : vector<8x32xbf16>, vector<32x128xbf16>, vector<8x128xf32> -> vector<8x128xf32>
    %19 = arith.addf %16, %18 : vector<8x128xf32>
    %20 = arith.negf %19 : vector<8x128xf32>
    %21 = math.exp %20 : vector<8x128xf32>
    %cst_19 = arith.constant 1.000000e+00 : f32
    %22 = vector.broadcast %cst_19 : f32 to vector<8x128xf32>
    %23 = arith.addf %22, %21 : vector<8x128xf32>
    %24 = arith.divf %22, %23 : vector<8x128xf32>
    %25 = vector.extract_strided_slice %24 {offsets = [0, 0], sizes = [8, 32], strides = [1, 1]} : vector<8x128xf32> to vector<8x32xf32>
    %26 = vector.extract_strided_slice %24 {offsets = [0, 32], sizes = [8, 32], strides = [1, 1]} : vector<8x128xf32> to vector<8x32xf32>
    %27 = vector.extract_strided_slice %24 {offsets = [0, 96], sizes = [8, 32], strides = [1, 1]} : vector<8x128xf32> to vector<8x32xf32>
    %28 = vector.extract_strided_slice %19 {offsets = [0, 64], sizes = [8, 32], strides = [1, 1]} : vector<8x128xf32> to vector<8x32xf32>
    %29 = math.tanh %28 : vector<8x32xf32>
    %30 = arith.mulf %26, %8 : vector<8x32xf32>
    %31 = arith.mulf %25, %29 : vector<8x32xf32>
    %32 = arith.addf %30, %31 : vector<8x32xf32>
    %33 = math.tanh %32 : vector<8x32xf32>
    %34 = arith.mulf %27, %33 : vector<8x32xf32>
    %35 = arith.truncf %34 : vector<8x32xf32> to vector<8x32xbf16>
    %c0_20 = arith.constant 0 : index
    %c0_21 = arith.constant 0 : index
    %36 = vector.load %arg9[%c0_20, %c0_21] : memref<64x32xbf16, #tpu.memory_space<vmem>>, vector<8x32xbf16>
    tpu.vector_store %arg9[%c0_20, %c0_21], %35 {strides = array<i32>} : memref<64x32xbf16, #tpu.memory_space<vmem>>, vector<8x32xbf16>,
    %37 = vector.extract_strided_slice %14 {offsets = [8, 0], sizes = [8, 128], strides = [1, 1]} : vector<64x128xf32> to vector<8x128xf32>
    %38 = arith.truncf %34 : vector<8x32xf32> to vector<8x32xbf16>
    %cst_22 = arith.constant dense<0.000000e+00> : vector<8x128xf32>
    %39 = tpu.matmul %38, %15, %cst_22 {dimension_numbers = #tpu.dot_dimension_numbers<[1], [0], [0], [1], [0, 0, 1, 1], [], []>} : vector<8x32xbf16>, vector<32x128xbf16>, vector<8x128xf32> -> vector<8x128xf32>
    %40 = arith.addf %37, %39 : vector<8x128xf32>
    %41 = arith.negf %40 : vector<8x128xf32>
    %42 = math.exp %41 : vector<8x128xf32>
    %cst_23 = arith.constant 1.000000e+00 : f32
    %43 = vector.broadcast %cst_23 : f32 to vector<8x128xf32>
    %44 = arith.addf %43, %42 : vector<8x128xf32>
    %45 = arith.divf %43, %44 : vector<8x128xf32>
    %46 = vector.extract_strided_slice %45 {offsets = [0, 0], sizes = [8, 32], strides = [1, 1]} : vector<8x128xf32> to vector<8x32xf32>
    %47 = vector.extract_strided_slice %45 {offsets = [0, 32], sizes = [8, 32], strides = [1, 1]} : vector<8x128xf32> to vector<8x32xf32>
    %48 = vector.extract_strided_slice %45 {offsets = [0, 96], sizes = [8, 32], strides = [1, 1]} : vector<8x128xf32> to vector<8x32xf32>
    %49 = vector.extract_strided_slice %40 {offsets = [0, 64], sizes = [8, 32], strides = [1, 1]} : vector<8x128xf32> to vector<8x32xf32>
    %50 = math.tanh %49 : vector<8x32xf32>
    %51 = arith.mulf %47, %32 : vector<8x32xf32>
    %52 = arith.mulf %46, %50 : vector<8x32xf32>
    %53 = arith.addf %51, %52 : vector<8x32xf32>
    %54 = math.tanh %53 : vector<8x32xf32>
    %55 = arith.mulf %48, %54 : vector<8x32xf32>
    %56 = arith.truncf %55 : vector<8x32xf32> to vector<8x32xbf16>
    %c8 = arith.constant 8 : index
    %c0_24 = arith.constant 0 : index
    %57 = vector.load %arg9[%c8, %c0_24] : memref<64x32xbf16, #tpu.memory_space<vmem>>, vector<8x32xbf16>
    tpu.vector_store %arg9[%c8, %c0_24], %56 {strides = array<i32>} : memref<64x32xbf16, #tpu.memory_space<vmem>>, vector<8x32xbf16>,
    %58 = vector.extract_strided_slice %14 {offsets = [16, 0], sizes = [8, 128], strides = [1, 1]} : vector<64x128xf32> to vector<8x128xf32>
    %59 = arith.truncf %55 : vector<8x32xf32> to vector<8x32xbf16>
    %cst_25 = arith.constant dense<0.000000e+00> : vector<8x128xf32>
    %60 = tpu.matmul %59, %15, %cst_25 {dimension_numbers = #tpu.dot_dimension_numbers<[1], [0], [0], [1], [0, 0, 1, 1], [], []>} : vector<8x32xbf16>, vector<32x128xbf16>, vector<8x128xf32> -> vector<8x128xf32>
    %61 = arith.addf %58, %60 : vector<8x128xf32>
    %62 = arith.negf %61 : vector<8x128xf32>
    %63 = math.exp %62 : vector<8x128xf32>
    %cst_26 = arith.constant 1.000000e+00 : f32
    %64 = vector.broadcast %cst_26 : f32 to vector<8x128xf32>
    %65 = arith.addf %64, %63 : vector<8x128xf32>
    %66 = arith.divf %64, %65 : vector<8x128xf32>
    %67 = vector.extract_strided_slice %66 {offsets = [0, 0], sizes = [8, 32], strides = [1, 1]} : vector<8x128xf32> to vector<8x32xf32>
    %68 = vector.extract_strided_slice %66 {offsets = [0, 32], sizes = [8, 32], strides = [1, 1]} : vector<8x128xf32> to vector<8x32xf32>
    %69 = vector.extract_strided_slice %66 {offsets = [0, 96], sizes = [8, 32], strides = [1, 1]} : vector<8x128xf32> to vector<8x32xf32>
    %70 = vector.extract_strided_slice %61 {offsets = [0, 64], sizes = [8, 32], strides = [1, 1]} : vector<8x128xf32> to vector<8x32xf32>
    %71 = math.tanh %70 : vector<8x32xf32>
    %72 = arith.mulf %68, %53 : vector<8x32xf32>
    %73 = arith.mulf %67, %71 : vector<8x32xf32>
    %74 = arith.addf %72, %73 : vector<8x32xf32>
    %75 = math.tanh %74 : vector<8x32xf32>
    %76 = arith.mulf %69, %75 : vector<8x32xf32>
    %77 = arith.truncf %76 : vector<8x32xf32> to vector<8x32xbf16>
    %c16 = arith.constant 16 : index
    %c0_27 = arith.constant 0 : index
    %78 = vector.load %arg9[%c16, %c0_27] : memref<64x32xbf16, #tpu.memory_space<vmem>>, vector<8x32xbf16>
    tpu.vector_store %arg9[%c16, %c0_27], %77 {strides = array<i32>} : memref<64x32xbf16, #tpu.memory_space<vmem>>, vector<8x32xbf16>,
    %79 = vector.extract_strided_slice %14 {offsets = [24, 0], sizes = [8, 128], strides = [1, 1]} : vector<64x128xf32> to vector<8x128xf32>
    %80 = arith.truncf %76 : vector<8x32xf32> to vector<8x32xbf16>
    %cst_28 = arith.constant dense<0.000000e+00> : vector<8x128xf32>
    %81 = tpu.matmul %80, %15, %cst_28 {dimension_numbers = #tpu.dot_dimension_numbers<[1], [0], [0], [1], [0, 0, 1, 1], [], []>} : vector<8x32xbf16>, vector<32x128xbf16>, vector<8x128xf32> -> vector<8x128xf32>
    %82 = arith.addf %79, %81 : vector<8x128xf32>
    %83 = arith.negf %82 : vector<8x128xf32>
    %84 = math.exp %83 : vector<8x128xf32>
    %cst_29 = arith.constant 1.000000e+00 : f32
    %85 = vector.broadcast %cst_29 : f32 to vector<8x128xf32>
    %86 = arith.addf %85, %84 : vector<8x128xf32>
    %87 = arith.divf %85, %86 : vector<8x128xf32>
    %88 = vector.extract_strided_slice %87 {offsets = [0, 0], sizes = [8, 32], strides = [1, 1]} : vector<8x128xf32> to vector<8x32xf32>
    %89 = vector.extract_strided_slice %87 {offsets = [0, 32], sizes = [8, 32], strides = [1, 1]} : vector<8x128xf32> to vector<8x32xf32>
    %90 = vector.extract_strided_slice %87 {offsets = [0, 96], sizes = [8, 32], strides = [1, 1]} : vector<8x128xf32> to vector<8x32xf32>
    %91 = vector.extract_strided_slice %82 {offsets = [0, 64], sizes = [8, 32], strides = [1, 1]} : vector<8x128xf32> to vector<8x32xf32>
    %92 = math.tanh %91 : vector<8x32xf32>
    %93 = arith.mulf %89, %74 : vector<8x32xf32>
    %94 = arith.mulf %88, %92 : vector<8x32xf32>
    %95 = arith.addf %93, %94 : vector<8x32xf32>
    %96 = math.tanh %95 : vector<8x32xf32>
    %97 = arith.mulf %90, %96 : vector<8x32xf32>
    %98 = arith.truncf %97 : vector<8x32xf32> to vector<8x32xbf16>
    %c24 = arith.constant 24 : index
    %c0_30 = arith.constant 0 : index
    %99 = vector.load %arg9[%c24, %c0_30] : memref<64x32xbf16, #tpu.memory_space<vmem>>, vector<8x32xbf16>
    tpu.vector_store %arg9[%c24, %c0_30], %98 {strides = array<i32>} : memref<64x32xbf16, #tpu.memory_space<vmem>>, vector<8x32xbf16>,
    %100 = vector.extract_strided_slice %14 {offsets = [32, 0], sizes = [8, 128], strides = [1, 1]} : vector<64x128xf32> to vector<8x128xf32>
    %101 = arith.truncf %97 : vector<8x32xf32> to vector<8x32xbf16>
    %cst_31 = arith.constant dense<0.000000e+00> : vector<8x128xf32>
    %102 = tpu.matmul %101, %15, %cst_31 {dimension_numbers = #tpu.dot_dimension_numbers<[1], [0], [0], [1], [0, 0, 1, 1], [], []>} : vector<8x32xbf16>, vector<32x128xbf16>, vector<8x128xf32> -> vector<8x128xf32>
    %103 = arith.addf %100, %102 : vector<8x128xf32>
    %104 = arith.negf %103 : vector<8x128xf32>
    %105 = math.exp %104 : vector<8x128xf32>
    %cst_32 = arith.constant 1.000000e+00 : f32
    %106 = vector.broadcast %cst_32 : f32 to vector<8x128xf32>
    %107 = arith.addf %106, %105 : vector<8x128xf32>
    %108 = arith.divf %106, %107 : vector<8x128xf32>
    %109 = vector.extract_strided_slice %108 {offsets = [0, 0], sizes = [8, 32], strides = [1, 1]} : vector<8x128xf32> to vector<8x32xf32>
    %110 = vector.extract_strided_slice %108 {offsets = [0, 32], sizes = [8, 32], strides = [1, 1]} : vector<8x128xf32> to vector<8x32xf32>
    %111 = vector.extract_strided_slice %108 {offsets = [0, 96], sizes = [8, 32], strides = [1, 1]} : vector<8x128xf32> to vector<8x32xf32>
    %112 = vector.extract_strided_slice %103 {offsets = [0, 64], sizes = [8, 32], strides = [1, 1]} : vector<8x128xf32> to vector<8x32xf32>
    %113 = math.tanh %112 : vector<8x32xf32>
    %114 = arith.mulf %110, %95 : vector<8x32xf32>
    %115 = arith.mulf %109, %113 : vector<8x32xf32>
    %116 = arith.addf %114, %115 : vector<8x32xf32>
    %117 = math.tanh %116 : vector<8x32xf32>
    %118 = arith.mulf %111, %117 : vector<8x32xf32>
    %119 = arith.truncf %118 : vector<8x32xf32> to vector<8x32xbf16>
    %c32 = arith.constant 32 : index
    %c0_33 = arith.constant 0 : index
    %120 = vector.load %arg9[%c32, %c0_33] : memref<64x32xbf16, #tpu.memory_space<vmem>>, vector<8x32xbf16>
    tpu.vector_store %arg9[%c32, %c0_33], %119 {strides = array<i32>} : memref<64x32xbf16, #tpu.memory_space<vmem>>, vector<8x32xbf16>,
    %121 = vector.extract_strided_slice %14 {offsets = [40, 0], sizes = [8, 128], strides = [1, 1]} : vector<64x128xf32> to vector<8x128xf32>
    %122 = arith.truncf %118 : vector<8x32xf32> to vector<8x32xbf16>
    %cst_34 = arith.constant dense<0.000000e+00> : vector<8x128xf32>
    %123 = tpu.matmul %122, %15, %cst_34 {dimension_numbers = #tpu.dot_dimension_numbers<[1], [0], [0], [1], [0, 0, 1, 1], [], []>} : vector<8x32xbf16>, vector<32x128xbf16>, vector<8x128xf32> -> vector<8x128xf32>
    %124 = arith.addf %121, %123 : vector<8x128xf32>
    %125 = arith.negf %124 : vector<8x128xf32>
    %126 = math.exp %125 : vector<8x128xf32>
    %cst_35 = arith.constant 1.000000e+00 : f32
    %127 = vector.broadcast %cst_35 : f32 to vector<8x128xf32>
    %128 = arith.addf %127, %126 : vector<8x128xf32>
    %129 = arith.divf %127, %128 : vector<8x128xf32>
    %130 = vector.extract_strided_slice %129 {offsets = [0, 0], sizes = [8, 32], strides = [1, 1]} : vector<8x128xf32> to vector<8x32xf32>
    %131 = vector.extract_strided_slice %129 {offsets = [0, 32], sizes = [8, 32], strides = [1, 1]} : vector<8x128xf32> to vector<8x32xf32>
    %132 = vector.extract_strided_slice %129 {offsets = [0, 96], sizes = [8, 32], strides = [1, 1]} : vector<8x128xf32> to vector<8x32xf32>
    %133 = vector.extract_strided_slice %124 {offsets = [0, 64], sizes = [8, 32], strides = [1, 1]} : vector<8x128xf32> to vector<8x32xf32>
    %134 = math.tanh %133 : vector<8x32xf32>
    %135 = arith.mulf %131, %116 : vector<8x32xf32>
    %136 = arith.mulf %130, %134 : vector<8x32xf32>
    %137 = arith.addf %135, %136 : vector<8x32xf32>
    %138 = math.tanh %137 : vector<8x32xf32>
    %139 = arith.mulf %132, %138 : vector<8x32xf32>
    %140 = arith.truncf %139 : vector<8x32xf32> to vector<8x32xbf16>
    %c40 = arith.constant 40 : index
    %c0_36 = arith.constant 0 : index
    %141 = vector.load %arg9[%c40, %c0_36] : memref<64x32xbf16, #tpu.memory_space<vmem>>, vector<8x32xbf16>
    tpu.vector_store %arg9[%c40, %c0_36], %140 {strides = array<i32>} : memref<64x32xbf16, #tpu.memory_space<vmem>>, vector<8x32xbf16>,
    %142 = vector.extract_strided_slice %14 {offsets = [48, 0], sizes = [8, 128], strides = [1, 1]} : vector<64x128xf32> to vector<8x128xf32>
    %143 = arith.truncf %139 : vector<8x32xf32> to vector<8x32xbf16>
    %cst_37 = arith.constant dense<0.000000e+00> : vector<8x128xf32>
    %144 = tpu.matmul %143, %15, %cst_37 {dimension_numbers = #tpu.dot_dimension_numbers<[1], [0], [0], [1], [0, 0, 1, 1], [], []>} : vector<8x32xbf16>, vector<32x128xbf16>, vector<8x128xf32> -> vector<8x128xf32>
    %145 = arith.addf %142, %144 : vector<8x128xf32>
    %146 = arith.negf %145 : vector<8x128xf32>
    %147 = math.exp %146 : vector<8x128xf32>
    %cst_38 = arith.constant 1.000000e+00 : f32
    %148 = vector.broadcast %cst_38 : f32 to vector<8x128xf32>
    %149 = arith.addf %148, %147 : vector<8x128xf32>
    %150 = arith.divf %148, %149 : vector<8x128xf32>
    %151 = vector.extract_strided_slice %150 {offsets = [0, 0], sizes = [8, 32], strides = [1, 1]} : vector<8x128xf32> to vector<8x32xf32>
    %152 = vector.extract_strided_slice %150 {offsets = [0, 32], sizes = [8, 32], strides = [1, 1]} : vector<8x128xf32> to vector<8x32xf32>
    %153 = vector.extract_strided_slice %150 {offsets = [0, 96], sizes = [8, 32], strides = [1, 1]} : vector<8x128xf32> to vector<8x32xf32>
    %154 = vector.extract_strided_slice %145 {offsets = [0, 64], sizes = [8, 32], strides = [1, 1]} : vector<8x128xf32> to vector<8x32xf32>
    %155 = math.tanh %154 : vector<8x32xf32>
    %156 = arith.mulf %152, %137 : vector<8x32xf32>
    %157 = arith.mulf %151, %155 : vector<8x32xf32>
    %158 = arith.addf %156, %157 : vector<8x32xf32>
    %159 = math.tanh %158 : vector<8x32xf32>
    %160 = arith.mulf %153, %159 : vector<8x32xf32>
    %161 = arith.truncf %160 : vector<8x32xf32> to vector<8x32xbf16>
    %c48 = arith.constant 48 : index
    %c0_39 = arith.constant 0 : index
    %162 = vector.load %arg9[%c48, %c0_39] : memref<64x32xbf16, #tpu.memory_space<vmem>>, vector<8x32xbf16>
    tpu.vector_store %arg9[%c48, %c0_39], %161 {strides = array<i32>} : memref<64x32xbf16, #tpu.memory_space<vmem>>, vector<8x32xbf16>,
    %163 = vector.extract_strided_slice %14 {offsets = [56, 0], sizes = [8, 128], strides = [1, 1]} : vector<64x128xf32> to vector<8x128xf32>
    %164 = arith.truncf %160 : vector<8x32xf32> to vector<8x32xbf16>
    %cst_40 = arith.constant dense<0.000000e+00> : vector<8x128xf32>
    %165 = tpu.matmul %164, %15, %cst_40 {dimension_numbers = #tpu.dot_dimension_numbers<[1], [0], [0], [1], [0, 0, 1, 1], [], []>} : vector<8x32xbf16>, vector<32x128xbf16>, vector<8x128xf32> -> vector<8x128xf32>
    %166 = arith.addf %163, %165 : vector<8x128xf32>
    %167 = arith.negf %166 : vector<8x128xf32>
    %168 = math.exp %167 : vector<8x128xf32>
    %cst_41 = arith.constant 1.000000e+00 : f32
    %169 = vector.broadcast %cst_41 : f32 to vector<8x128xf32>
    %170 = arith.addf %169, %168 : vector<8x128xf32>
    %171 = arith.divf %169, %170 : vector<8x128xf32>
    %172 = vector.extract_strided_slice %171 {offsets = [0, 0], sizes = [8, 32], strides = [1, 1]} : vector<8x128xf32> to vector<8x32xf32>
    %173 = vector.extract_strided_slice %171 {offsets = [0, 32], sizes = [8, 32], strides = [1, 1]} : vector<8x128xf32> to vector<8x32xf32>
    %174 = vector.extract_strided_slice %171 {offsets = [0, 96], sizes = [8, 32], strides = [1, 1]} : vector<8x128xf32> to vector<8x32xf32>
    %175 = vector.extract_strided_slice %166 {offsets = [0, 64], sizes = [8, 32], strides = [1, 1]} : vector<8x128xf32> to vector<8x32xf32>
    %176 = math.tanh %175 : vector<8x32xf32>
    %177 = arith.mulf %173, %158 : vector<8x32xf32>
    %178 = arith.mulf %172, %176 : vector<8x32xf32>
    %179 = arith.addf %177, %178 : vector<8x32xf32>
    %180 = math.tanh %179 : vector<8x32xf32>
    %181 = arith.mulf %174, %180 : vector<8x32xf32>
    %182 = arith.truncf %181 : vector<8x32xf32> to vector<8x32xbf16>
    %c56 = arith.constant 56 : index
    %c0_42 = arith.constant 0 : index
    %183 = vector.load %arg9[%c56, %c0_42] : memref<64x32xbf16, #tpu.memory_space<vmem>>, vector<8x32xbf16>
    tpu.vector_store %arg9[%c56, %c0_42], %182 {strides = array<i32>} : memref<64x32xbf16, #tpu.memory_space<vmem>>, vector<8x32xbf16>,
    %c0_43 = arith.constant 0 : index
    %c0_44 = arith.constant 0 : index
    %184 = vector.load %arg10[%c0_43, %c0_44] : memref<8x32xf32, #tpu.memory_space<vmem>>, vector<8x32xf32>
    tpu.vector_store %arg10[%c0_43, %c0_44], %181 {strides = array<i32>} : memref<8x32xf32, #tpu.memory_space<vmem>>, vector<8x32xf32>,
    %c0_45 = arith.constant 0 : index
    %c0_46 = arith.constant 0 : index
    %185 = vector.load %arg11[%c0_45, %c0_46] : memref<8x32xf32, #tpu.memory_space<vmem>>, vector<8x32xf32>
    tpu.vector_store %arg11[%c0_45, %c0_46], %179 {strides = array<i32>} : memref<8x32xf32, #tpu.memory_space<vmem>>, vector<8x32xf32>,
    return
  }
}

</mosaic_0001>

<llo_original>
// kernel: decoder_lstm_forward.3
$region0: #{decoder_lstm_forward.3}
  #allocation0 [shape = 'u32[]', space=smem, size = 0x4, offset = 0x4, fixed_abs, tag = 'smem constant byte address 0x4 - core index']
  #allocation1 [shape = 'u32[144,128]{1,0:T(1,128)}', space=vmem, size = 0x12000, scoped, tag = 'internal scratch']
  #allocation2 [shape = 'f32[64,1]{1,0:T(8,128)}', space=vmem, size = 0x8000, scoped, tag = 'scratch operand']
  #allocation3 [shape = 'f32[64,1]{1,0:T(8,128)}', space=vmem, size = 0x8000, scoped, tag = 'scratch operand']
  %s0 = inlined_call_operand.vmem [shape: bf16[64,32], index: 0, kind: input, shape index: {}]
  %s1 = inlined_call_operand.vmem [shape: bf16[32,128], index: 1, kind: input, shape index: {}]
  %s2 = inlined_call_operand.vmem [shape: f32[1,128], index: 2, kind: input, shape index: {}]
  %s3 = inlined_call_operand.vmem [shape: f32[64,128], index: 3, kind: output, shape index: {0}]
  %s4 = inlined_call_operand.vmem [shape: f32[64,1], index: 4, kind: output, shape index: {1}]
  %5 = xla_tuple %s3, %s4
  %s6 = sld [smem:[#allocation0]]
  $region38: #{decoder_lstm_forward.3} parent=0
    _
  %s8 = ssub.s32 1, %s6
  %s9 = scalar_select 0, %s8, %s6
  // Predicated region
  $region2: #{decoder_lstm_forward.3} parent=0 // pred_check
    _
  $region3: #{decoder_lstm_forward.3} parent=0 // pred_check_branch
    %11 = sbr.rel (0) target = $region5
  $region4: #{decoder_lstm_forward.3} parent=0 // pred_region
    _
  $region5: #{decoder_lstm_forward.3} parent=0 // pred_fallthru
    _
  // Predicated region
  $region6: #{decoder_lstm_forward.3} parent=0 // pred_check
    _
  $region7: #{decoder_lstm_forward.3} parent=0 // pred_check_branch
    %13 = sbr.rel (0) target = $region9
  $region8: #{decoder_lstm_forward.3} parent=0 // pred_region
    _
  $region9: #{decoder_lstm_forward.3} parent=0 // pred_fallthru
    _
  // Predicated region
  $region10: #{decoder_lstm_forward.3} parent=0 // pred_check
    _
  $region11: #{decoder_lstm_forward.3} parent=0 // pred_check_branch
    %15 = sbr.rel (0) target = $region13
  $region12: #{decoder_lstm_forward.3} parent=0 // pred_region
    _
  $region13: #{decoder_lstm_forward.3} parent=0 // pred_fallthru
    _
  %p17 = scmp.eq.s32.totalorder 0, 0
  // Predicated region
  $region14: #{decoder_lstm_forward.3} parent=0 // pred_check
    %p18 = pneg %p17
  $region15: #{decoder_lstm_forward.3} parent=0 // pred_check_branch
    %20 = sbr.rel (%p18) target = $region17
  $region16: #{decoder_lstm_forward.3} parent=0 // pred_region
    %vm21 = vcmask 7168
    %22 = vst.msk [vmem:[#allocation2] sm:$0xff] %vm21, -inf
    %23 = vst.msk [vmem:[#allocation2 + $0x8] sm:$0xff] %vm21, -inf
    %24 = vst.msk [vmem:[#allocation2 + $0x10] sm:$0xff] %vm21, -inf
    %25 = vst.msk [vmem:[#allocation2 + $0x18] sm:$0xff] %vm21, -inf
    %26 = vst.msk [vmem:[#allocation2 + $0x20] sm:$0xff] %vm21, -inf
    %27 = vst.msk [vmem:[#allocation2 + $0x28] sm:$0xff] %vm21, -inf
    %28 = vst.msk [vmem:[#allocation2 + $0x30] sm:$0xff] %vm21, -inf
    %29 = vst.msk [vmem:[#allocation2 + $0x38] sm:$0xff] %vm21, -inf
    %30 = vst.msk [vmem:[#allocation3] sm:$0xff] %vm21, 0.0
    %31 = vst.msk [vmem:[#allocation3 + $0x8] sm:$0xff] %vm21, 0.0
    %32 = vst.msk [vmem:[#allocation3 + $0x10] sm:$0xff] %vm21, 0.0
    %33 = vst.msk [vmem:[#allocation3 + $0x18] sm:$0xff] %vm21, 0.0
    %34 = vst.msk [vmem:[#allocation3 + $0x20] sm:$0xff] %vm21, 0.0
    %35 = vst.msk [vmem:[#allocation3 + $0x28] sm:$0xff] %vm21, 0.0
    %36 = vst.msk [vmem:[#allocation3 + $0x30] sm:$0xff] %vm21, 0.0
    %37 = vst.msk [vmem:[#allocation3 + $0x38] sm:$0xff] %vm21, 0.0
  $region17: #{decoder_lstm_forward.3} parent=0 // pred_fallthru
    _
  %v38 = vld [vmem:[%s0] sm:$0xf]
  %v39 = vld [vmem:[%s0 + $0x4] sm:$0xf]
  %v40 = vld [vmem:[%s0 + $0x8] sm:$0xf]
  %v41 = vld [vmem:[%s0 + $0xc] sm:$0xf]
  %v42 = vld [vmem:[%s0 + $0x10] sm:$0xf]
  %v43 = vld [vmem:[%s0 + $0x14] sm:$0xf]
  %v44 = vld [vmem:[%s0 + $0x18] sm:$0xf]
  %v45 = vld [vmem:[%s0 + $0x1c] sm:$0xf]
  %v46 = vld [vmem:[%s1] sm:$0xf]
  %v47 = vld [vmem:[%s1 + $0x4] sm:$0xf]
  %v48 = vld [vmem:[%s1 + $0x8] sm:$0xf]
  %v49 = vld [vmem:[%s1 + $0xc] sm:$0xf]
  %v50 = vld [vmem:[%s2] sm:$0x1]
  %v52 = vlaneseq
  %v53 = vshrl.u32 %v52, 7
  %v54 = vsub.s32 0, %v53
  %v55 = vrot.slane %v50, %v54
  %v65 = vunpack.c.l.b16 %v38
  %v66 = vunpack.c.l.b16 %v39
  %v67 = vunpack.c.l.b16 %v40
  %v68 = vunpack.c.l.b16 %v41
  %v69 = vunpack.c.l.b16 %v42
  %v70 = vunpack.c.l.b16 %v43
  %v71 = vunpack.c.l.b16 %v44
  %v72 = vunpack.c.l.b16 %v45
  %v73 = vpack.c.b16 %v66, %v65
  %v74 = vpack.c.b16 %v68, %v67
  %v75 = vpack.c.b16 %v70, %v69
  %v76 = vpack.c.b16 %v72, %v71
  %v81 = vunpack.c.l.b16 %v46
  %v82 = vunpack.c.l.b16 %v47
  %v83 = vunpack.c.l.b16 %v48
  %v84 = vunpack.c.l.b16 %v49
  %v85 = vpack.c.b16 %v82, %v81
  %v86 = vpack.c.b16 %v84, %v83
  %vm89 = vcmask 261120
  %v91 = vsel %vm89, %v73, 0
  %v94 = vsel %vm89, %v74, 0
  %v97 = vsel %vm89, %v75, 0
  %v100 = vsel %vm89, %v76, 0
  %102 = vmatprep.subr.bf16.mxu0 0
  %103 = vmatpush1.bf16.msra.mxu0 0
  %104 = vmatprep.subr.bf16.mxu0 0
  %105 = vmatpush1.bf16.msra.mxu0 0
  %106 = vmatprep.subr.bf16.mxu0 0
  %107 = vmatpush1.bf16.msra.mxu0 0
  %108 = vmatprep.subr.bf16.mxu0 0
  %109 = vmatpush1.bf16.msra.mxu0 0
  %110 = vmatprep.subr.bf16.mxu0 0
  %111 = vmatpush1.bf16.msra.mxu0 0
  %112 = vmatprep.subr.bf16.mxu0 0
  %113 = vmatpush1.bf16.msra.mxu0 0
  %114 = vmatprep.subr.bf16.mxu0 0
  %115 = vmatpush1.bf16.msra.mxu0 %v86
  %116 = vmatprep.subr.bf16.mxu0 0
  %117 = vmatpush1.bf16.msra.mxu0 %v85
  %118 = vmatprep.subr.bf16.mxu0 0
  %119 = vmatpush2.bf16.msra.mxu0 0
  %120 = vmatprep.subr.bf16.mxu0 0
  %121 = vmatpush2.bf16.msra.mxu0 0
  %122 = vmatprep.subr.bf16.mxu0 0
  %123 = vmatpush2.bf16.msra.mxu0 0
  %124 = vmatprep.subr.bf16.mxu0 0
  %125 = vmatpush2.bf16.msra.mxu0 0
  %126 = vmatprep.subr.bf16.mxu0 0
  %127 = vmatpush2.bf16.msra.mxu0 0
  %128 = vmatprep.subr.bf16.mxu0 0
  %129 = vmatpush2.bf16.msra.mxu0 0
  %130 = vmatprep.subr.bf16.mxu0 0
  %131 = vmatpush2.bf16.msra.mxu0 0
  %132 = vmatprep.subr.bf16.mxu0 0
  %133 = vmatpush2.bf16.msra.mxu0 0
  %134 = vmatprep.mubr.bf16.mxu0 0
  %135 = vmatmul.mubr.bf16.gmra.mxu0 %v91
  %v136 = vpop.f32.mrf.mxu0
  %v137 = vadd.f32 %v55, %v136
  %v138 = vpop.f32.mrf.mxu0
  %v139 = vpop.f32.mrf.mxu0
  %v140 = vadd.f32 %v55, %v139
  %v141 = vpop.f32.mrf.mxu0
  %142 = vmatprep.mubr.bf16.mxu0 0
  %143 = vmatmul.mubr.bf16.gmra.mxu0 %v94
  %v144 = vpop.f32.mrf.mxu0
  %v145 = vadd.f32 %v55, %v144
  %v146 = vpop.f32.mrf.mxu0
  %v147 = vpop.f32.mrf.mxu0
  %v148 = vadd.f32 %v55, %v147
  %v149 = vpop.f32.mrf.mxu0
  %150 = vmatprep.mubr.bf16.mxu0 0
  %151 = vmatmul.mubr.bf16.gmra.mxu0 %v97
  %v152 = vpop.f32.mrf.mxu0
  %v153 = vadd.f32 %v55, %v152
  %v154 = vpop.f32.mrf.mxu0
  %v155 = vpop.f32.mrf.mxu0
  %v156 = vadd.f32 %v55, %v155
  %v157 = vpop.f32.mrf.mxu0
  %158 = vmatprep.mubr.bf16.mxu0 0
  %159 = vmatmul.mubr.bf16.gmra.mxu0 %v100
  %v160 = vpop.f32.mrf.mxu0
  %v161 = vadd.f32 %v55, %v160
  %v162 = vpop.f32.mrf.mxu0
  %v163 = vpop.f32.mrf.mxu0
  %v164 = vadd.f32 %v55, %v163
  %v165 = vpop.f32.mrf.mxu0
  %166 = vdwg.mxu0
  %167 = vst [vmem:[%s3] sm:$0xff] %v137
  %168 = vst [vmem:[%s3 + $0x8] sm:$0xff] %v140
  %169 = vst [vmem:[%s3 + $0x10] sm:$0xff] %v145
  %170 = vst [vmem:[%s3 + $0x18] sm:$0xff] %v148
  %171 = vst [vmem:[%s3 + $0x20] sm:$0xff] %v153
  %172 = vst [vmem:[%s3 + $0x28] sm:$0xff] %v156
  %173 = vst [vmem:[%s3 + $0x30] sm:$0xff] %v161
  %174 = vst [vmem:[%s3 + $0x38] sm:$0xff] %v164
  %v175 = vld [vmem:[#allocation2] sm:$0xff]
  %v176 = vld [vmem:[#allocation2 + $0x8] sm:$0xff]
  %v177 = vld [vmem:[#allocation2 + $0x10] sm:$0xff]
  %v178 = vld [vmem:[#allocation2 + $0x18] sm:$0xff]
  %v179 = vld [vmem:[#allocation2 + $0x20] sm:$0xff]
  %v180 = vld [vmem:[#allocation2 + $0x28] sm:$0xff]
  %v181 = vld [vmem:[#allocation2 + $0x30] sm:$0xff]
  %v182 = vld [vmem:[#allocation2 + $0x38] sm:$0xff]
  %183 = vmax.xlane.f32.xlu0 %v137
  %v184 = vpop.xlane.xlu0 %183
  %185 = vmax.xlane.f32.xlu0 %v140
  %v186 = vpop.xlane.xlu0 %185
  %187 = vmax.xlane.f32.xlu0 %v145
  %v188 = vpop.xlane.xlu0 %187
  %189 = vmax.xlane.f32.xlu0 %v148
  %v190 = vpop.xlane.xlu0 %189
  %191 = vmax.xlane.f32.xlu0 %v153
  %v192 = vpop.xlane.xlu0 %191
  %193 = vmax.xlane.f32.xlu0 %v156
  %v194 = vpop.xlane.xlu0 %193
  %195 = vmax.xlane.f32.xlu0 %v161
  %v196 = vpop.xlane.xlu0 %195
  %197 = vmax.xlane.f32.xlu0 %v164
  %v198 = vpop.xlane.xlu0 %197
  %v199 = vmax.f32 %v175, %v184
  %v200 = vmax.f32 %v176, %v186
  %v201 = vmax.f32 %v177, %v188
  %v202 = vmax.f32 %v178, %v190
  %v203 = vmax.f32 %v179, %v192
  %v204 = vmax.f32 %v180, %v194
  %v205 = vmax.f32 %v181, %v196
  %v206 = vmax.f32 %v182, %v198
  %v207 = vld [vmem:[#allocation3] sm:$0xff]
  %v208 = vld [vmem:[#allocation3 + $0x8] sm:$0xff]
  %v209 = vld [vmem:[#allocation3 + $0x10] sm:$0xff]
  %v210 = vld [vmem:[#allocation3 + $0x18] sm:$0xff]
  %v211 = vld [vmem:[#allocation3 + $0x20] sm:$0xff]
  %v212 = vld [vmem:[#allocation3 + $0x28] sm:$0xff]
  %v213 = vld [vmem:[#allocation3 + $0x30] sm:$0xff]
  %v214 = vld [vmem:[#allocation3 + $0x38] sm:$0xff]
  %v215 = vsub.f32 %v175, %v199
  %v216 = vsub.f32 %v176, %v200
  %v217 = vsub.f32 %v177, %v201
  %v218 = vsub.f32 %v178, %v202
  %v219 = vsub.f32 %v179, %v203
  %v220 = vsub.f32 %v180, %v204
  %v221 = vsub.f32 %v181, %v205
  %v222 = vsub.f32 %v182, %v206
  %v223 = vmul.f32 %v215, 1.442695
  %v224 = vpow.pop %v223
  %v225 = vmul.f32 %v216, 1.442695
  %v226 = vpow.pop %v225
  %v227 = vmul.f32 %v217, 1.442695
  %v228 = vpow.pop %v227
  %v229 = vmul.f32 %v218, 1.442695
  %v230 = vpow.pop %v229
  %v231 = vmul.f32 %v219, 1.442695
  %v232 = vpow.pop %v231
  %v233 = vmul.f32 %v220, 1.442695
  %v234 = vpow.pop %v233
  %v235 = vmul.f32 %v221, 1.442695
  %v236 = vpow.pop %v235
  %v237 = vmul.f32 %v222, 1.442695
  %v238 = vpow.pop %v237
  %v239 = vmul.f32 %v207, %v224
  %v240 = vmul.f32 %v208, %v226
  %v241 = vmul.f32 %v209, %v228
  %v242 = vmul.f32 %v210, %v230
  %v243 = vmul.f32 %v211, %v232
  %v244 = vmul.f32 %v212, %v234
  %v245 = vmul.f32 %v213, %v236
  %v246 = vmul.f32 %v214, %v238
  %248 = vset.pattern.permute.xlu0 0
  %249 = vperm.xlu0 %248, %v199
  %v250 = vpop.permute.xlu0 %249
  %253 = vset.pattern.permute.xlu0 0
  %254 = vperm.xlu0 %253, %v200
  %v255 = vpop.permute.xlu0 %254
  %258 = vset.pattern.permute.xlu0 0
  %259 = vperm.xlu0 %258, %v201
  %v260 = vpop.permute.xlu0 %259
  %263 = vset.pattern.permute.xlu0 0
  %264 = vperm.xlu0 %263, %v202
  %v265 = vpop.permute.xlu0 %264
  %268 = vset.pattern.permute.xlu0 0
  %269 = vperm.xlu0 %268, %v203
  %v270 = vpop.permute.xlu0 %269
  %273 = vset.pattern.permute.xlu0 0
  %274 = vperm.xlu0 %273, %v204
  %v275 = vpop.permute.xlu0 %274
  %278 = vset.pattern.permute.xlu0 0
  %279 = vperm.xlu0 %278, %v205
  %v280 = vpop.permute.xlu0 %279
  %283 = vset.pattern.permute.xlu0 0
  %284 = vperm.xlu0 %283, %v206
  %v285 = vpop.permute.xlu0 %284
  %v287 = vsub.f32 %v137, %v250
  %v288 = vsub.f32 %v140, %v255
  %v289 = vsub.f32 %v145, %v260
  %v290 = vsub.f32 %v148, %v265
  %v291 = vsub.f32 %v153, %v270
  %v292 = vsub.f32 %v156, %v275
  %v293 = vsub.f32 %v161, %v280
  %v294 = vsub.f32 %v164, %v285
  %v295 = vmul.f32 %v287, 1.442695
  %v296 = vpow.pop %v295
  %v297 = vmul.f32 %v288, 1.442695
  %v298 = vpow.pop %v297
  %v299 = vmul.f32 %v289, 1.442695
  %v300 = vpow.pop %v299
  %v301 = vmul.f32 %v290, 1.442695
  %v302 = vpow.pop %v301
  %v303 = vmul.f32 %v291, 1.442695
  %v304 = vpow.pop %v303
  %v305 = vmul.f32 %v292, 1.442695
  %v306 = vpow.pop %v305
  %v307 = vmul.f32 %v293, 1.442695
  %v308 = vpow.pop %v307
  %v309 = vmul.f32 %v294, 1.442695
  %v310 = vpow.pop %v309
  %311 = vadd.xlane.f32.xlu0 %v296
  %v312 = vpop.xlane.xlu0 %311
  %313 = vadd.xlane.f32.xlu0 %v298
  %v314 = vpop.xlane.xlu0 %313
  %315 = vadd.xlane.f32.xlu0 %v300
  %v316 = vpop.xlane.xlu0 %315
  %317 = vadd.xlane.f32.xlu0 %v302
  %v318 = vpop.xlane.xlu0 %317
  %319 = vadd.xlane.f32.xlu0 %v304
  %v320 = vpop.xlane.xlu0 %319
  %321 = vadd.xlane.f32.xlu0 %v306
  %v322 = vpop.xlane.xlu0 %321
  %323 = vadd.xlane.f32.xlu0 %v308
  %v324 = vpop.xlane.xlu0 %323
  %325 = vadd.xlane.f32.xlu0 %v310
  %v326 = vpop.xlane.xlu0 %325
  %v327 = vadd.f32 %v239, %v312
  %v328 = vadd.f32 %v240, %v314
  %v329 = vadd.f32 %v241, %v316
  %v330 = vadd.f32 %v242, %v318
  %v331 = vadd.f32 %v243, %v320
  %v332 = vadd.f32 %v244, %v322
  %v333 = vadd.f32 %v245, %v324
  %v334 = vadd.f32 %v246, %v326
  %vm335 = vcmask 7168
  %336 = vst.msk [vmem:[#allocation3] sm:$0xff] %vm335, %v327
  %337 = vst.msk [vmem:[#allocation3 + $0x8] sm:$0xff] %vm335, %v328
  %338 = vst.msk [vmem:[#allocation3 + $0x10] sm:$0xff] %vm335, %v329
  %339 = vst.msk [vmem:[#allocation3 + $0x18] sm:$0xff] %vm335, %v330
  %340 = vst.msk [vmem:[#allocation3 + $0x20] sm:$0xff] %vm335, %v331
  %341 = vst.msk [vmem:[#allocation3 + $0x28] sm:$0xff] %vm335, %v332
  %342 = vst.msk [vmem:[#allocation3 + $0x30] sm:$0xff] %vm335, %v333
  %343 = vst.msk [vmem:[#allocation3 + $0x38] sm:$0xff] %vm335, %v334
  %344 = vst.msk [vmem:[#allocation2] sm:$0xff] %vm335, %v199
  %345 = vst.msk [vmem:[#allocation2 + $0x8] sm:$0xff] %vm335, %v200
  %346 = vst.msk [vmem:[#allocation2 + $0x10] sm:$0xff] %vm335, %v201
  %347 = vst.msk [vmem:[#allocation2 + $0x18] sm:$0xff] %vm335, %v202
  %348 = vst.msk [vmem:[#allocation2 + $0x20] sm:$0xff] %vm335, %v203
  %349 = vst.msk [vmem:[#allocation2 + $0x28] sm:$0xff] %vm335, %v204
  %350 = vst.msk [vmem:[#allocation2 + $0x30] sm:$0xff] %vm335, %v205
  %351 = vst.msk [vmem:[#allocation2 + $0x38] sm:$0xff] %vm335, %v206
  // Predicated region
  $region18: #{decoder_lstm_forward.3} parent=0 // pred_check
    %p352 = pneg %p17
  $region19: #{decoder_lstm_forward.3} parent=0 // pred_check_branch
    %354 = sbr.rel (%p352) target = $region21
  $region20: #{decoder_lstm_forward.3} parent=0 // pred_region
    %v355 = vld [vmem:[#allocation2] sm:$0xff]
    %v356 = vld [vmem:[#allocation2 + $0x8] sm:$0xff]
    %v357 = vld [vmem:[#allocation2 + $0x10] sm:$0xff]
    %v358 = vld [vmem:[#allocation2 + $0x18] sm:$0xff]
    %v359 = vld [vmem:[#allocation2 + $0x20] sm:$0xff]
    %v360 = vld [vmem:[#allocation2 + $0x28] sm:$0xff]
    %v361 = vld [vmem:[#allocation2 + $0x30] sm:$0xff]
    %v362 = vld [vmem:[#allocation2 + $0x38] sm:$0xff]
    %v363 = vld [vmem:[#allocation3] sm:$0xff]
    %v364 = vld [vmem:[#allocation3 + $0x8] sm:$0xff]
    %v365 = vld [vmem:[#allocation3 + $0x10] sm:$0xff]
    %v366 = vld [vmem:[#allocation3 + $0x18] sm:$0xff]
    %v367 = vld [vmem:[#allocation3 + $0x20] sm:$0xff]
    %v368 = vld [vmem:[#allocation3 + $0x28] sm:$0xff]
    %v369 = vld [vmem:[#allocation3 + $0x30] sm:$0xff]
    %v370 = vld [vmem:[#allocation3 + $0x38] sm:$0xff]
    %v371 = vlog2.pop %v363
    %v372 = vmul.f32 %v371, 0.6931472
    %v373 = vlog2.pop %v364
    %v374 = vmul.f32 %v373, 0.6931472
    %v375 = vlog2.pop %v365
    %v376 = vmul.f32 %v375, 0.6931472
    %v377 = vlog2.pop %v366
    %v378 = vmul.f32 %v377, 0.6931472
    %v379 = vlog2.pop %v367
    %v380 = vmul.f32 %v379, 0.6931472
    %v381 = vlog2.pop %v368
    %v382 = vmul.f32 %v381, 0.6931472
    %v383 = vlog2.pop %v369
    %v384 = vmul.f32 %v383, 0.6931472
    %v385 = vlog2.pop %v370
    %v386 = vmul.f32 %v385, 0.6931472
    %v387 = vadd.f32 %v355, %v372
    %v388 = vadd.f32 %v356, %v374
    %v389 = vadd.f32 %v357, %v376
    %v390 = vadd.f32 %v358, %v378
    %v391 = vadd.f32 %v359, %v380
    %v392 = vadd.f32 %v360, %v382
    %v393 = vadd.f32 %v361, %v384
    %v394 = vadd.f32 %v362, %v386
    %395 = vst.msk [vmem:[%s4] sm:$0xff] %vm335, %v387
    %396 = vst.msk [vmem:[%s4 + $0x8] sm:$0xff] %vm335, %v388
    %397 = vst.msk [vmem:[%s4 + $0x10] sm:$0xff] %vm335, %v389
    %398 = vst.msk [vmem:[%s4 + $0x18] sm:$0xff] %vm335, %v390
    %399 = vst.msk [vmem:[%s4 + $0x20] sm:$0xff] %vm335, %v391
    %400 = vst.msk [vmem:[%s4 + $0x28] sm:$0xff] %vm335, %v392
    %401 = vst.msk [vmem:[%s4 + $0x30] sm:$0xff] %vm335, %v393
    %402 = vst.msk [vmem:[%s4 + $0x38] sm:$0xff] %vm335, %v394
  $region21: #{decoder_lstm_forward.3} parent=0 // pred_fallthru
    _
  // Predicated region
  $region22: #{decoder_lstm_forward.3} parent=0 // pred_check
    _
  $region23: #{decoder_lstm_forward.3} parent=0 // pred_check_branch
    %404 = sbr.rel (0) target = $region25
  $region24: #{decoder_lstm_forward.3} parent=0 // pred_region
    _
  $region25: #{decoder_lstm_forward.3} parent=0 // pred_fallthru
    _
  // Predicated region
  $region26: #{decoder_lstm_forward.3} parent=0 // pred_check
    _
  $region27: #{decoder_lstm_forward.3} parent=0 // pred_check_branch
    %406 = sbr.rel (0) target = $region29
  $region28: #{decoder_lstm_forward.3} parent=0 // pred_region
    _
  $region29: #{decoder_lstm_forward.3} parent=0 // pred_fallthru
    _
  // Predicated region
  $region30: #{decoder_lstm_forward.3} parent=0 // pred_check
    _
  $region31: #{decoder_lstm_forward.3} parent=0 // pred_check_branch
    %408 = sbr.rel (0) target = $region33
  $region32: #{decoder_lstm_forward.3} parent=0 // pred_region
    _
  $region33: #{decoder_lstm_forward.3} parent=0 // pred_fallthru
    _
  // Predicated region
  $region34: #{decoder_lstm_forward.3} parent=0 // pred_check
    _
  $region35: #{decoder_lstm_forward.3} parent=0 // pred_check_branch
    %410 = sbr.rel (0) target = $region37
  $region36: #{decoder_lstm_forward.3} parent=0 // pred_region
    _
  $region37: #{decoder_lstm_forward.3} parent=0 // pred_fallthru
    _

// kernel: decoder_lstm_forward.2
$region0: #{decoder_lstm_forward.2}
  #allocation0 [shape = 'u32[]', space=smem, size = 0x4, offset = 0x4, fixed_abs, tag = 'smem constant byte address 0x4 - core index']
  #allocation1 [shape = 'u32[144,128]{1,0:T(1,128)}', space=vmem, size = 0x12000, scoped, tag = 'internal scratch']
  %s0 = inlined_call_operand.vmem [shape: bf16[64,32], index: 0, kind: input, shape index: {}]
  %s1 = inlined_call_operand.vmem [shape: f32[8,32], index: 1, kind: input, shape index: {}]
  %s2 = inlined_call_operand.vmem [shape: f32[8,32], index: 2, kind: input, shape index: {}]
  %s3 = inlined_call_operand.vmem [shape: bf16[8,64], index: 3, kind: input, shape index: {}]
  %s4 = inlined_call_operand.vmem [shape: bf16[64,32], index: 4, kind: input, shape index: {}]
  %s5 = inlined_call_operand.vmem [shape: f32[1,32], index: 5, kind: input, shape index: {}]
  %s6 = inlined_call_operand.vmem [shape: bf16[32,128], index: 6, kind: input, shape index: {}]
  %s7 = inlined_call_operand.vmem [shape: f32[1,128], index: 7, kind: input, shape index: {}]
  %s8 = inlined_call_operand.vmem [shape: bf16[32,128], index: 8, kind: input, shape index: {}]
  %s9 = inlined_call_operand.vmem [shape: bf16[64,32], index: 9, kind: output, shape index: {0}]
  %s10 = inlined_call_operand.hbm [shape: f32[8,32], index: 10, kind: output, shape index: {1}]
  %s11 = inlined_call_operand.hbm [shape: f32[8,32], index: 11, kind: output, shape index: {2}]
  %12 = xla_tuple %s9, %s10, %s11
  %s13 = sld [smem:[#allocation0]]
  $region62: #{decoder_lstm_forward.2} parent=0
    _
  %s15 = ssub.s32 1, %s13
  %s16 = scalar_select 0, %s15, %s13
  $region1: #{decoder_lstm_forward.2} parent=0
    #allocation2 [shape = 'u8[4096]{0}', space=vmem, size = 0x1000, scoped, tag = 'output window, operand 1, single buffered']
    #allocation3 [shape = 's32[1]{0}', space=sflag, size = 0x4, scoped, tag = 'scoped memory for decoder_lstm_forward.2']
    #allocation4 [shape = 'u8[4096]{0}', space=vmem, size = 0x1000, scoped, tag = 'output window, operand 2, single buffered']
    #allocation5 [shape = 's32[1]{0}', space=sflag, size = 0x4, scoped, tag = 'scoped memory for decoder_lstm_forward.2']
    %17 = vsyncpa [#allocation3], 0
    %18 = vsyncpa [#allocation5], 0
    // Predicated region
    $region2: #{decoder_lstm_forward.2} parent=1 // pred_check
      _
    $region3: #{decoder_lstm_forward.2} parent=1 // pred_check_branch
      %20 = sbr.rel (0) target = $region5
    $region4: #{decoder_lstm_forward.2} parent=1 // pred_region
      _
    $region5: #{decoder_lstm_forward.2} parent=1 // pred_fallthru
      _
    // Predicated region
    $region6: #{decoder_lstm_forward.2} parent=1 // pred_check
      _
    $region7: #{decoder_lstm_forward.2} parent=1 // pred_check_branch
      %22 = sbr.rel (0) target = $region9
    $region8: #{decoder_lstm_forward.2} parent=1 // pred_region
      _
    $region9: #{decoder_lstm_forward.2} parent=1 // pred_fallthru
      _
    // Predicated region
    $region10: #{decoder_lstm_forward.2} parent=1 // pred_check
      _
    $region11: #{decoder_lstm_forward.2} parent=1 // pred_check_branch
      %24 = sbr.rel (0) target = $region13
    $region12: #{decoder_lstm_forward.2} parent=1 // pred_region
      _
    $region13: #{decoder_lstm_forward.2} parent=1 // pred_fallthru
      _
    // Predicated region
    $region14: #{decoder_lstm_forward.2} parent=1 // pred_check
      _
    $region15: #{decoder_lstm_forward.2} parent=1 // pred_check_branch
      %26 = sbr.rel (0) target = $region17
    $region16: #{decoder_lstm_forward.2} parent=1 // pred_region
      _
    $region17: #{decoder_lstm_forward.2} parent=1 // pred_fallthru
      _
    // Predicated region
    $region18: #{decoder_lstm_forward.2} parent=1 // pred_check
      _
    $region19: #{decoder_lstm_forward.2} parent=1 // pred_check_branch
      %28 = sbr.rel (0) target = $region21
    $region20: #{decoder_lstm_forward.2} parent=1 // pred_region
      _
    $region21: #{decoder_lstm_forward.2} parent=1 // pred_fallthru
      _
    // Predicated region
    $region22: #{decoder_lstm_forward.2} parent=1 // pred_check
      _
    $region23: #{decoder_lstm_forward.2} parent=1 // pred_check_branch
      %30 = sbr.rel (0) target = $region25
    $region24: #{decoder_lstm_forward.2} parent=1 // pred_region
      _
    $region25: #{decoder_lstm_forward.2} parent=1 // pred_fallthru
      _
    // Predicated region
    $region26: #{decoder_lstm_forward.2} parent=1 // pred_check
      _
    $region27: #{decoder_lstm_forward.2} parent=1 // pred_check_branch
      %32 = sbr.rel (0) target = $region29
    $region28: #{decoder_lstm_forward.2} parent=1 // pred_region
      _
    $region29: #{decoder_lstm_forward.2} parent=1 // pred_fallthru
      _
    // Predicated region
    $region30: #{decoder_lstm_forward.2} parent=1 // pred_check
      _
    $region31: #{decoder_lstm_forward.2} parent=1 // pred_check_branch
      %34 = sbr.rel (0) target = $region33
    $region32: #{decoder_lstm_forward.2} parent=1 // pred_region
      _
    $region33: #{decoder_lstm_forward.2} parent=1 // pred_fallthru
      _
    // Predicated region
    $region34: #{decoder_lstm_forward.2} parent=1 // pred_check
      _
    $region35: #{decoder_lstm_forward.2} parent=1 // pred_check_branch
      %36 = sbr.rel (0) target = $region37
    $region36: #{decoder_lstm_forward.2} parent=1 // pred_region
      _
    $region37: #{decoder_lstm_forward.2} parent=1 // pred_fallthru
      _
    %v38 = vld [vmem:[%s3] sm:$0xf]
    %v39 = vld [vmem:[%s4] sm:$0xf]
    %v40 = vld [vmem:[%s4 + $0x4] sm:$0xf]
    %v41 = vld [vmem:[%s4 + $0x8] sm:$0xf]
    %v42 = vld [vmem:[%s4 + $0xc] sm:$0xf]
    %v43 = vld [vmem:[%s4 + $0x10] sm:$0xf]
    %v44 = vld [vmem:[%s4 + $0x14] sm:$0xf]
    %v45 = vld [vmem:[%s4 + $0x18] sm:$0xf]
    %v46 = vld [vmem:[%s4 + $0x1c] sm:$0xf]
    %v47 = vld [vmem:[%s5] sm:$0x1]
    %v49 = vlaneseq
    %v50 = vshrl.u32 %v49, 7
    %v51 = vsub.s32 0, %v50
    %v52 = vrot.slane %v47, %v51
    %v62 = vunpack.c.l.b16 %v39
    %v63 = vunpack.c.l.b16 %v40
    %v64 = vunpack.c.l.b16 %v41
    %v65 = vunpack.c.l.b16 %v42
    %v66 = vunpack.c.l.b16 %v43
    %v67 = vunpack.c.l.b16 %v44
    %v68 = vunpack.c.l.b16 %v45
    %v69 = vunpack.c.l.b16 %v46
    %v70 = vpack.c.b16 %v63, %v62
    %v71 = vpack.c.b16 %v65, %v64
    %v72 = vpack.c.b16 %v67, %v66
    %v73 = vpack.c.b16 %v69, %v68
    %vm78 = vcmask 523264
    %v80 = vsel %vm78, %v38, 0
    %82 = vmatprep.subr.bf16.mxu0 0
    %83 = vmatpush1.bf16.msra.mxu0 0
    %84 = vmatprep.subr.bf16.mxu0 0
    %85 = vmatpush1.bf16.msra.mxu0 0
    %86 = vmatprep.subr.bf16.mxu0 0
    %87 = vmatpush1.bf16.msra.mxu0 0
    %88 = vmatprep.subr.bf16.mxu0 0
    %89 = vmatpush1.bf16.msra.mxu0 0
    %90 = vmatprep.subr.bf16.mxu0 0
    %91 = vmatpush1.bf16.msra.mxu0 %v73
    %92 = vmatprep.subr.bf16.mxu0 0
    %93 = vmatpush1.bf16.msra.mxu0 %v72
    %94 = vmatprep.subr.bf16.mxu0 0
    %95 = vmatpush1.bf16.msra.mxu0 %v71
    %96 = vmatprep.subr.bf16.mxu0 0
    %97 = vmatpush1.bf16.msra.mxu0 %v70
    %98 = vmatprep.subr.bf16.mxu0 0
    %99 = vmatpush2.bf16.msra.mxu0 0
    %100 = vmatprep.subr.bf16.mxu0 0
    %101 = vmatpush2.bf16.msra.mxu0 0
    %102 = vmatprep.subr.bf16.mxu0 0
    %103 = vmatpush2.bf16.msra.mxu0 0
    %104 = vmatprep.subr.bf16.mxu0 0
    %105 = vmatpush2.bf16.msra.mxu0 0
    %106 = vmatprep.subr.bf16.mxu0 0
    %107 = vmatpush2.bf16.msra.mxu0 0
    %108 = vmatprep.subr.bf16.mxu0 0
    %109 = vmatpush2.bf16.msra.mxu0 0
    %110 = vmatprep.subr.bf16.mxu0 0
    %111 = vmatpush2.bf16.msra.mxu0 0
    %112 = vmatprep.subr.bf16.mxu0 0
    %113 = vmatpush2.bf16.msra.mxu0 0
    %114 = vmatprep.mubr.bf16.mxu0 0
    %115 = vmatmul.mubr.bf16.gmra.mxu0 %v80
    %v116 = vpop.f32.mrf.mxu0
    %v117 = vadd.f32 %v52, %v116
    %v118 = vpop.f32.mrf.mxu0
    %v119 = vpop.f32.mrf.mxu0
    %v120 = vpop.f32.mrf.mxu0
    %121 = vdwg.mxu0
    %v122 = vld [vmem:[%s1] sm:$0xff]
    %v123 = vmul.f32 %v122, %v117
    %v124 = vld [vmem:[%s2] sm:$0xff]
    %v125 = vld [vmem:[%s0] sm:$0xf]
    %v126 = vld [vmem:[%s0 + $0x4] sm:$0xf]
    %v127 = vld [vmem:[%s0 + $0x8] sm:$0xf]
    %v128 = vld [vmem:[%s0 + $0xc] sm:$0xf]
    %v129 = vld [vmem:[%s0 + $0x10] sm:$0xf]
    %v130 = vld [vmem:[%s0 + $0x14] sm:$0xf]
    %v131 = vld [vmem:[%s0 + $0x18] sm:$0xf]
    %v132 = vld [vmem:[%s0 + $0x1c] sm:$0xf]
    %v133 = vld [vmem:[%s6] sm:$0xf]
    %v134 = vld [vmem:[%s6 + $0x4] sm:$0xf]
    %v135 = vld [vmem:[%s6 + $0x8] sm:$0xf]
    %v136 = vld [vmem:[%s6 + $0xc] sm:$0xf]
    %v137 = vld [vmem:[%s7] sm:$0x1]
    %v139 = vlaneseq
    %v140 = vshrl.u32 %v139, 7
    %v141 = vsub.s32 0, %v140
    %v142 = vrot.slane %v137, %v141
    %v152 = vunpack.c.l.b16 %v125
    %v153 = vunpack.c.l.b16 %v126
    %v154 = vunpack.c.l.b16 %v127
    %v155 = vunpack.c.l.b16 %v128
    %v156 = vunpack.c.l.b16 %v129
    %v157 = vunpack.c.l.b16 %v130
    %v158 = vunpack.c.l.b16 %v131
    %v159 = vunpack.c.l.b16 %v132
    %v160 = vpack.c.b16 %v153, %v152
    %v161 = vpack.c.b16 %v155, %v154
    %v162 = vpack.c.b16 %v157, %v156
    %v163 = vpack.c.b16 %v159, %v158
    %v168 = vunpack.c.l.b16 %v133
    %v169 = vunpack.c.l.b16 %v134
    %v170 = vunpack.c.l.b16 %v135
    %v171 = vunpack.c.l.b16 %v136
    %v172 = vpack.c.b16 %v169, %v168
    %v173 = vpack.c.b16 %v171, %v170
    %vm176 = vcmask 261120
    %v178 = vsel %vm176, %v160, 0
    %v181 = vsel %vm176, %v161, 0
    %v184 = vsel %vm176, %v162, 0
    %v187 = vsel %vm176, %v163, 0
    %189 = vmatprep.subr.bf16.mxu0 0
    %190 = vmatpush1.bf16.msra.mxu0 0
    %191 = vmatprep.subr.bf16.mxu0 0
    %192 = vmatpush1.bf16.msra.mxu0 0
    %193 = vmatprep.subr.bf16.mxu0 0
    %194 = vmatpush1.bf16.msra.mxu0 0
    %195 = vmatprep.subr.bf16.mxu0 0
    %196 = vmatpush1.bf16.msra.mxu0 0
    %197 = vmatprep.subr.bf16.mxu0 0
    %198 = vmatpush1.bf16.msra.mxu0 0
    %199 = vmatprep.subr.bf16.mxu0 0
    %200 = vmatpush1.bf16.msra.mxu0 0
    %201 = vmatprep.subr.bf16.mxu0 0
    %202 = vmatpush1.bf16.msra.mxu0 %v173
    %203 = vmatprep.subr.bf16.mxu0 0
    %204 = vmatpush1.bf16.msra.mxu0 %v172
    %205 = vmatprep.subr.bf16.mxu0 0
    %206 = vmatpush2.bf16.msra.mxu0 0
    %207 = vmatprep.subr.bf16.mxu0 0
    %208 = vmatpush2.bf16.msra.mxu0 0
    %209 = vmatprep.subr.bf16.mxu0 0
    %210 = vmatpush2.bf16.msra.mxu0 0
    %211 = vmatprep.subr.bf16.mxu0 0
    %212 = vmatpush2.bf16.msra.mxu0 0
    %213 = vmatprep.subr.bf16.mxu0 0
    %214 = vmatpush2.bf16.msra.mxu0 0
    %215 = vmatprep.subr.bf16.mxu0 0
    %216 = vmatpush2.bf16.msra.mxu0 0
    %217 = vmatprep.subr.bf16.mxu0 0
    %218 = vmatpush2.bf16.msra.mxu0 0
    %219 = vmatprep.subr.bf16.mxu0 0
    %220 = vmatpush2.bf16.msra.mxu0 0
    %221 = vmatprep.mubr.bf16.mxu0 0
    %222 = vmatmul.mubr.bf16.gmra.mxu0 %v178
    %v223 = vpop.f32.mrf.mxu0
    %v224 = vadd.f32 %v142, %v223
    %v225 = vpop.f32.mrf.mxu0
    %v226 = vpop.f32.mrf.mxu0
    %v227 = vadd.f32 %v142, %v226
    %v228 = vpop.f32.mrf.mxu0
    %229 = vmatprep.mubr.bf16.mxu0 0
    %230 = vmatmul.mubr.bf16.gmra.mxu0 %v181
    %v231 = vpop.f32.mrf.mxu0
    %v232 = vadd.f32 %v142, %v231
    %v233 = vpop.f32.mrf.mxu0
    %v234 = vpop.f32.mrf.mxu0
    %v235 = vadd.f32 %v142, %v234
    %v236 = vpop.f32.mrf.mxu0
    %237 = vmatprep.mubr.bf16.mxu0 0
    %238 = vmatmul.mubr.bf16.gmra.mxu0 %v184
    %v239 = vpop.f32.mrf.mxu0
    %v240 = vadd.f32 %v142, %v239
    %v241 = vpop.f32.mrf.mxu0
    %v242 = vpop.f32.mrf.mxu0
    %v243 = vadd.f32 %v142, %v242
    %v244 = vpop.f32.mrf.mxu0
    %245 = vmatprep.mubr.bf16.mxu0 0
    %246 = vmatmul.mubr.bf16.gmra.mxu0 %v187
    %v247 = vpop.f32.mrf.mxu0
    %v248 = vadd.f32 %v142, %v247
    %v249 = vpop.f32.mrf.mxu0
    %v250 = vpop.f32.mrf.mxu0
    %v251 = vadd.f32 %v142, %v250
    %v252 = vpop.f32.mrf.mxu0
    %253 = vdwg.mxu0
    %v254 = vld [vmem:[%s8] sm:$0xf]
    %v255 = vld [vmem:[%s8 + $0x4] sm:$0xf]
    %v256 = vld [vmem:[%s8 + $0x8] sm:$0xf]
    %v257 = vld [vmem:[%s8 + $0xc] sm:$0xf]
    %v258 = vpack.c.bf16 %v123, %v123
    %v263 = vunpack.c.l.b16 %v254
    %v264 = vunpack.c.l.b16 %v255
    %v265 = vunpack.c.l.b16 %v256
    %v266 = vunpack.c.l.b16 %v257
    %v267 = vpack.c.b16 %v264, %v263
    %v268 = vpack.c.b16 %v266, %v265
    %v272 = vsel %vm176, %v258, 0
    %274 = vmatprep.subr.bf16.mxu0 0
    %275 = vmatpush1.bf16.msra.mxu0 0
    %276 = vmatprep.subr.bf16.mxu0 0
    %277 = vmatpush1.bf16.msra.mxu0 0
    %278 = vmatprep.subr.bf16.mxu0 0
    %279 = vmatpush1.bf16.msra.mxu0 0
    %280 = vmatprep.subr.bf16.mxu0 0
    %281 = vmatpush1.bf16.msra.mxu0 0
    %282 = vmatprep.subr.bf16.mxu0 0
    %283 = vmatpush1.bf16.msra.mxu0 0
    %284 = vmatprep.subr.bf16.mxu0 0
    %285 = vmatpush1.bf16.msra.mxu0 0
    %286 = vmatprep.subr.bf16.mxu0 0
    %287 = vmatpush1.bf16.msra.mxu0 %v268
    %288 = vmatprep.subr.bf16.mxu0 0
    %289 = vmatpush1.bf16.msra.mxu0 %v267
    %290 = vmatprep.subr.bf16.mxu0 0
    %291 = vmatpush2.bf16.msra.mxu0 0
    %292 = vmatprep.subr.bf16.mxu0 0
    %293 = vmatpush2.bf16.msra.mxu0 0
    %294 = vmatprep.subr.bf16.mxu0 0
    %295 = vmatpush2.bf16.msra.mxu0 0
    %296 = vmatprep.subr.bf16.mxu0 0
    %297 = vmatpush2.bf16.msra.mxu0 0
    %298 = vmatprep.subr.bf16.mxu0 0
    %299 = vmatpush2.bf16.msra.mxu0 0
    %300 = vmatprep.subr.bf16.mxu0 0
    %301 = vmatpush2.bf16.msra.mxu0 0
    %302 = vmatprep.subr.bf16.mxu0 0
    %303 = vmatpush2.bf16.msra.mxu0 0
    %304 = vmatprep.subr.bf16.mxu0 0
    %305 = vmatpush2.bf16.msra.mxu0 0
    %306 = vmatprep.mubr.bf16.mxu0 0
    %307 = vmatmul.mubr.bf16.gmra.mxu0 %v272
    %v308 = vpop.f32.mrf.mxu0
    %v309 = vadd.f32 0.0, %v308
    %v310 = vpop.f32.mrf.mxu0
    %v311 = vpop.f32.mrf.mxu0
    %v312 = vpop.f32.mrf.mxu0
    %313 = vdwg.mxu0
    %v314 = vadd.f32 %v224, %v309
    %v315 = vxor.u32 %v314, 2147483648
    %v316 = vmul.f32 %v315, 1.442695
    %v317 = vpow.pop %v316
    %v318 = vadd.f32 %v317, 1.0
    %v319 = vrcp.pop %v318
    %v320 = vmul.f32 1.0, %v319
    %v321 = vtanh.pop %v314
    %323 = vrot.lane.b32.xlu0 %v124, 32
    %v324 = vpop.permute.xlu0 %323
    %v326 = vmul.f32 %v320, %v324
    %328 = vrot.lane.b32.xlu0 %v321, 64
    %v329 = vpop.permute.xlu0 %328
    %v331 = vmul.f32 %v320, %v329
    %333 = vrot.lane.b32.xlu0 %v331, 32
    %v334 = vpop.permute.xlu0 %333
    %v336 = vadd.f32 %v326, %v334
    %v337 = vtanh.pop %v336
    %339 = vrot.lane.b32.xlu0 %v337, 64
    %v340 = vpop.permute.xlu0 %339
    %v342 = vmul.f32 %v320, %v340
    %v343 = vpack.c.bf16 %v342, %v342
    %v345 = vunpack.c.l.b16 %v343
    %v346 = vpack.c.b16 %v345, %v345
    %347 = vrot.lane.b32.xlu0 %v346, 32
    %v348 = vpop.permute.xlu0 %347
    %vm350 = vcmask 257024
    %351 = vst.msk [vmem:[%s9] sm:$0xf] %vm350, %v348
    %352 = vrot.lane.b32.xlu0 %v343, 32
    %v353 = vpop.permute.xlu0 %352
    %v355 = vsel %vm176, %v353, 0
    %357 = vmatprep.subr.bf16.mxu0 0
    %358 = vmatpush1.bf16.msra.mxu0 0
    %359 = vmatprep.subr.bf16.mxu0 0
    %360 = vmatpush1.bf16.msra.mxu0 0
    %361 = vmatprep.subr.bf16.mxu0 0
    %362 = vmatpush1.bf16.msra.mxu0 0
    %363 = vmatprep.subr.bf16.mxu0 0
    %364 = vmatpush1.bf16.msra.mxu0 0
    %365 = vmatprep.subr.bf16.mxu0 0
    %366 = vmatpush1.bf16.msra.mxu0 0
    %367 = vmatprep.subr.bf16.mxu0 0
    %368 = vmatpush1.bf16.msra.mxu0 0
    %369 = vmatprep.subr.bf16.mxu0 0
    %370 = vmatpush1.bf16.msra.mxu0 %v268
    %371 = vmatprep.subr.bf16.mxu0 0
    %372 = vmatpush1.bf16.msra.mxu0 %v267
    %373 = vmatprep.subr.bf16.mxu0 0
    %374 = vmatpush2.bf16.msra.mxu0 0
    %375 = vmatprep.subr.bf16.mxu0 0
    %376 = vmatpush2.bf16.msra.mxu0 0
    %377 = vmatprep.subr.bf16.mxu0 0
    %378 = vmatpush2.bf16.msra.mxu0 0
    %379 = vmatprep.subr.bf16.mxu0 0
    %380 = vmatpush2.bf16.msra.mxu0 0
    %381 = vmatprep.subr.bf16.mxu0 0
    %382 = vmatpush2.bf16.msra.mxu0 0
    %383 = vmatprep.subr.bf16.mxu0 0
    %384 = vmatpush2.bf16.msra.mxu0 0
    %385 = vmatprep.subr.bf16.mxu0 0
    %386 = vmatpush2.bf16.msra.mxu0 0
    %387 = vmatprep.subr.bf16.mxu0 0
    %388 = vmatpush2.bf16.msra.mxu0 0
    %389 = vmatprep.mubr.bf16.mxu0 0
    %390 = vmatmul.mubr.bf16.gmra.mxu0 %v355
    %v391 = vpop.f32.mrf.mxu0
    %v392 = vadd.f32 0.0, %v391
    %v393 = vpop.f32.mrf.mxu0
    %v394 = vpop.f32.mrf.mxu0
    %v395 = vpop.f32.mrf.mxu0
    %396 = vdwg.mxu0
    %v397 = vadd.f32 %v227, %v392
    %v398 = vxor.u32 %v397, 2147483648
    %v399 = vmul.f32 %v398, 1.442695
    %v400 = vpow.pop %v399
    %v401 = vadd.f32 %v400, 1.0
    %v402 = vrcp.pop %v401
    %v403 = vmul.f32 1.0, %v402
    %v404 = vtanh.pop %v397
    %v405 = vmul.f32 %v403, %v336
    %407 = vrot.lane.b32.xlu0 %v404, 64
    %v408 = vpop.permute.xlu0 %407
    %v410 = vmul.f32 %v403, %v408
    %412 = vrot.lane.b32.xlu0 %v410, 32
    %v413 = vpop.permute.xlu0 %412
    %v415 = vadd.f32 %v405, %v413
    %v416 = vtanh.pop %v415
    %418 = vrot.lane.b32.xlu0 %v416, 64
    %v419 = vpop.permute.xlu0 %418
    %v421 = vmul.f32 %v403, %v419
    %v422 = vpack.c.bf16 %v421, %v421
    %v424 = vunpack.c.l.b16 %v422
    %v425 = vpack.c.b16 %v424, %v424
    %426 = vrot.lane.b32.xlu0 %v425, 32
    %v427 = vpop.permute.xlu0 %426
    %429 = vst.msk [vmem:[%s9 + $0x4] sm:$0xf] %vm350, %v427
    %430 = vrot.lane.b32.xlu0 %v422, 32
    %v431 = vpop.permute.xlu0 %430
    %v433 = vsel %vm176, %v431, 0
    %435 = vmatprep.subr.bf16.mxu0 0
    %436 = vmatpush1.bf16.msra.mxu0 0
    %437 = vmatprep.subr.bf16.mxu0 0
    %438 = vmatpush1.bf16.msra.mxu0 0
    %439 = vmatprep.subr.bf16.mxu0 0
    %440 = vmatpush1.bf16.msra.mxu0 0
    %441 = vmatprep.subr.bf16.mxu0 0
    %442 = vmatpush1.bf16.msra.mxu0 0
    %443 = vmatprep.subr.bf16.mxu0 0
    %444 = vmatpush1.bf16.msra.mxu0 0
    %445 = vmatprep.subr.bf16.mxu0 0
    %446 = vmatpush1.bf16.msra.mxu0 0
    %447 = vmatprep.subr.bf16.mxu0 0
    %448 = vmatpush1.bf16.msra.mxu0 %v268
    %449 = vmatprep.subr.bf16.mxu0 0
    %450 = vmatpush1.bf16.msra.mxu0 %v267
    %451 = vmatprep.subr.bf16.mxu0 0
    %452 = vmatpush2.bf16.msra.mxu0 0
    %453 = vmatprep.subr.bf16.mxu0 0
    %454 = vmatpush2.bf16.msra.mxu0 0
    %455 = vmatprep.subr.bf16.mxu0 0
    %456 = vmatpush2.bf16.msra.mxu0 0
    %457 = vmatprep.subr.bf16.mxu0 0
    %458 = vmatpush2.bf16.msra.mxu0 0
    %459 = vmatprep.subr.bf16.mxu0 0
    %460 = vmatpush2.bf16.msra.mxu0 0
    %461 = vmatprep.subr.bf16.mxu0 0
    %462 = vmatpush2.bf16.msra.mxu0 0
    %463 = vmatprep.subr.bf16.mxu0 0
    %464 = vmatpush2.bf16.msra.mxu0 0
    %465 = vmatprep.subr.bf16.mxu0 0
    %466 = vmatpush2.bf16.msra.mxu0 0
    %467 = vmatprep.mubr.bf16.mxu0 0
    %468 = vmatmul.mubr.bf16.gmra.mxu0 %v433
    %v469 = vpop.f32.mrf.mxu0
    %v470 = vadd.f32 0.0, %v469
    %v471 = vpop.f32.mrf.mxu0
    %v472 = vpop.f32.mrf.mxu0
    %v473 = vpop.f32.mrf.mxu0
    %474 = vdwg.mxu0
    %v475 = vadd.f32 %v232, %v470
    %v476 = vxor.u32 %v475, 2147483648
    %v477 = vmul.f32 %v476, 1.442695
    %v478 = vpow.pop %v477
    %v479 = vadd.f32 %v478, 1.0
    %v480 = vrcp.pop %v479
    %v481 = vmul.f32 1.0, %v480
    %v482 = vtanh.pop %v475
    %v483 = vmul.f32 %v481, %v415
    %485 = vrot.lane.b32.xlu0 %v482, 64
    %v486 = vpop.permute.xlu0 %485
    %v488 = vmul.f32 %v481, %v486
    %490 = vrot.lane.b32.xlu0 %v488, 32
    %v491 = vpop.permute.xlu0 %490
    %v493 = vadd.f32 %v483, %v491
    %v494 = vtanh.pop %v493
    %496 = vrot.lane.b32.xlu0 %v494, 64
    %v497 = vpop.permute.xlu0 %496
    %v499 = vmul.f32 %v481, %v497
    %v500 = vpack.c.bf16 %v499, %v499
    %v502 = vunpack.c.l.b16 %v500
    %v503 = vpack.c.b16 %v502, %v502
    %504 = vrot.lane.b32.xlu0 %v503, 32
    %v505 = vpop.permute.xlu0 %504
    %507 = vst.msk [vmem:[%s9 + $0x8] sm:$0xf] %vm350, %v505
    %508 = vrot.lane.b32.xlu0 %v500, 32
    %v509 = vpop.permute.xlu0 %508
    %v511 = vsel %vm176, %v509, 0
    %513 = vmatprep.subr.bf16.mxu0 0
    %514 = vmatpush1.bf16.msra.mxu0 0
    %515 = vmatprep.subr.bf16.mxu0 0
    %516 = vmatpush1.bf16.msra.mxu0 0
    %517 = vmatprep.subr.bf16.mxu0 0
    %518 = vmatpush1.bf16.msra.mxu0 0
    %519 = vmatprep.subr.bf16.mxu0 0
    %520 = vmatpush1.bf16.msra.mxu0 0
    %521 = vmatprep.subr.bf16.mxu0 0
    %522 = vmatpush1.bf16.msra.mxu0 0
    %523 = vmatprep.subr.bf16.mxu0 0
    %524 = vmatpush1.bf16.msra.mxu0 0
    %525 = vmatprep.subr.bf16.mxu0 0
    %526 = vmatpush1.bf16.msra.mxu0 %v268
    %527 = vmatprep.subr.bf16.mxu0 0
    %528 = vmatpush1.bf16.msra.mxu0 %v267
    %529 = vmatprep.subr.bf16.mxu0 0
    %530 = vmatpush2.bf16.msra.mxu0 0
    %531 = vmatprep.subr.bf16.mxu0 0
    %532 = vmatpush2.bf16.msra.mxu0 0
    %533 = vmatprep.subr.bf16.mxu0 0
    %534 = vmatpush2.bf16.msra.mxu0 0
    %535 = vmatprep.subr.bf16.mxu0 0
    %536 = vmatpush2.bf16.msra.mxu0 0
    %537 = vmatprep.subr.bf16.mxu0 0
    %538 = vmatpush2.bf16.msra.mxu0 0
    %539 = vmatprep.subr.bf16.mxu0 0
    %540 = vmatpush2.bf16.msra.mxu0 0
    %541 = vmatprep.subr.bf16.mxu0 0
    %542 = vmatpush2.bf16.msra.mxu0 0
    %543 = vmatprep.subr.bf16.mxu0 0
    %544 = vmatpush2.bf16.msra.mxu0 0
    %545 = vmatprep.mubr.bf16.mxu0 0
    %546 = vmatmul.mubr.bf16.gmra.mxu0 %v511
    %v547 = vpop.f32.mrf.mxu0
    %v548 = vadd.f32 0.0, %v547
    %v549 = vpop.f32.mrf.mxu0
    %v550 = vpop.f32.mrf.mxu0
    %v551 = vpop.f32.mrf.mxu0
    %552 = vdwg.mxu0
    %v553 = vadd.f32 %v235, %v548
    %v554 = vxor.u32 %v553, 2147483648
    %v555 = vmul.f32 %v554, 1.442695
    %v556 = vpow.pop %v555
    %v557 = vadd.f32 %v556, 1.0
    %v558 = vrcp.pop %v557
    %v559 = vmul.f32 1.0, %v558
    %v560 = vtanh.pop %v553
    %v561 = vmul.f32 %v559, %v493
    %563 = vrot.lane.b32.xlu0 %v560, 64
    %v564 = vpop.permute.xlu0 %563
    %v566 = vmul.f32 %v559, %v564
    %568 = vrot.lane.b32.xlu0 %v566, 32
    %v569 = vpop.permute.xlu0 %568
    %v571 = vadd.f32 %v561, %v569
    %v572 = vtanh.pop %v571
    %574 = vrot.lane.b32.xlu0 %v572, 64
    %v575 = vpop.permute.xlu0 %574
    %v577 = vmul.f32 %v559, %v575
    %v578 = vpack.c.bf16 %v577, %v577
    %v580 = vunpack.c.l.b16 %v578
    %v581 = vpack.c.b16 %v580, %v580
    %582 = vrot.lane.b32.xlu0 %v581, 32
    %v583 = vpop.permute.xlu0 %582
    %585 = vst.msk [vmem:[%s9 + $0xc] sm:$0xf] %vm350, %v583
    %586 = vrot.lane.b32.xlu0 %v578, 32
    %v587 = vpop.permute.xlu0 %586
    %v589 = vsel %vm176, %v587, 0
    %591 = vmatprep.subr.bf16.mxu0 0
    %592 = vmatpush1.bf16.msra.mxu0 0
    %593 = vmatprep.subr.bf16.mxu0 0
    %594 = vmatpush1.bf16.msra.mxu0 0
    %595 = vmatprep.subr.bf16.mxu0 0
    %596 = vmatpush1.bf16.msra.mxu0 0
    %597 = vmatprep.subr.bf16.mxu0 0
    %598 = vmatpush1.bf16.msra.mxu0 0
    %599 = vmatprep.subr.bf16.mxu0 0
    %600 = vmatpush1.bf16.msra.mxu0 0
    %601 = vmatprep.subr.bf16.mxu0 0
    %602 = vmatpush1.bf16.msra.mxu0 0
    %603 = vmatprep.subr.bf16.mxu0 0
    %604 = vmatpush1.bf16.msra.mxu0 %v268
    %605 = vmatprep.subr.bf16.mxu0 0
    %606 = vmatpush1.bf16.msra.mxu0 %v267
    %607 = vmatprep.subr.bf16.mxu0 0
    %608 = vmatpush2.bf16.msra.mxu0 0
    %609 = vmatprep.subr.bf16.mxu0 0
    %610 = vmatpush2.bf16.msra.mxu0 0
    %611 = vmatprep.subr.bf16.mxu0 0
    %612 = vmatpush2.bf16.msra.mxu0 0
    %613 = vmatprep.subr.bf16.mxu0 0
    %614 = vmatpush2.bf16.msra.mxu0 0
    %615 = vmatprep.subr.bf16.mxu0 0
    %616 = vmatpush2.bf16.msra.mxu0 0
    %617 = vmatprep.subr.bf16.mxu0 0
    %618 = vmatpush2.bf16.msra.mxu0 0
    %619 = vmatprep.subr.bf16.mxu0 0
    %620 = vmatpush2.bf16.msra.mxu0 0
    %621 = vmatprep.subr.bf16.mxu0 0
    %622 = vmatpush2.bf16.msra.mxu0 0
    %623 = vmatprep.mubr.bf16.mxu0 0
    %624 = vmatmul.mubr.bf16.gmra.mxu0 %v589
    %v625 = vpop.f32.mrf.mxu0
    %v626 = vadd.f32 0.0, %v625
    %v627 = vpop.f32.mrf.mxu0
    %v628 = vpop.f32.mrf.mxu0
    %v629 = vpop.f32.mrf.mxu0
    %630 = vdwg.mxu0
    %v631 = vadd.f32 %v240, %v626
    %v632 = vxor.u32 %v631, 2147483648
    %v633 = vmul.f32 %v632, 1.442695
    %v634 = vpow.pop %v633
    %v635 = vadd.f32 %v634, 1.0
    %v636 = vrcp.pop %v635
    %v637 = vmul.f32 1.0, %v636
    %v638 = vtanh.pop %v631
    %v639 = vmul.f32 %v637, %v571
    %641 = vrot.lane.b32.xlu0 %v638, 64
    %v642 = vpop.permute.xlu0 %641
    %v644 = vmul.f32 %v637, %v642
    %646 = vrot.lane.b32.xlu0 %v644, 32
    %v647 = vpop.permute.xlu0 %646
    %v649 = vadd.f32 %v639, %v647
    %v650 = vtanh.pop %v649
    %652 = vrot.lane.b32.xlu0 %v650, 64
    %v653 = vpop.permute.xlu0 %652
    %v655 = vmul.f32 %v637, %v653
    %v656 = vpack.c.bf16 %v655, %v655
    %v658 = vunpack.c.l.b16 %v656
    %v659 = vpack.c.b16 %v658, %v658
    %660 = vrot.lane.b32.xlu0 %v659, 32
    %v661 = vpop.permute.xlu0 %660
    %663 = vst.msk [vmem:[%s9 + $0x10] sm:$0xf] %vm350, %v661
    %664 = vrot.lane.b32.xlu0 %v656, 32
    %v665 = vpop.permute.xlu0 %664
    %v667 = vsel %vm176, %v665, 0
    %669 = vmatprep.subr.bf16.mxu0 0
    %670 = vmatpush1.bf16.msra.mxu0 0
    %671 = vmatprep.subr.bf16.mxu0 0
    %672 = vmatpush1.bf16.msra.mxu0 0
    %673 = vmatprep.subr.bf16.mxu0 0
    %674 = vmatpush1.bf16.msra.mxu0 0
    %675 = vmatprep.subr.bf16.mxu0 0
    %676 = vmatpush1.bf16.msra.mxu0 0
    %677 = vmatprep.subr.bf16.mxu0 0
    %678 = vmatpush1.bf16.msra.mxu0 0
    %679 = vmatprep.subr.bf16.mxu0 0
    %680 = vmatpush1.bf16.msra.mxu0 0
    %681 = vmatprep.subr.bf16.mxu0 0
    %682 = vmatpush1.bf16.msra.mxu0 %v268
    %683 = vmatprep.subr.bf16.mxu0 0
    %684 = vmatpush1.bf16.msra.mxu0 %v267
    %685 = vmatprep.subr.bf16.mxu0 0
    %686 = vmatpush2.bf16.msra.mxu0 0
    %687 = vmatprep.subr.bf16.mxu0 0
    %688 = vmatpush2.bf16.msra.mxu0 0
    %689 = vmatprep.subr.bf16.mxu0 0
    %690 = vmatpush2.bf16.msra.mxu0 0
    %691 = vmatprep.subr.bf16.mxu0 0
    %692 = vmatpush2.bf16.msra.mxu0 0
    %693 = vmatprep.subr.bf16.mxu0 0
    %694 = vmatpush2.bf16.msra.mxu0 0
    %695 = vmatprep.subr.bf16.mxu0 0
    %696 = vmatpush2.bf16.msra.mxu0 0
    %697 = vmatprep.subr.bf16.mxu0 0
    %698 = vmatpush2.bf16.msra.mxu0 0
    %699 = vmatprep.subr.bf16.mxu0 0
    %700 = vmatpush2.bf16.msra.mxu0 0
    %701 = vmatprep.mubr.bf16.mxu0 0
    %702 = vmatmul.mubr.bf16.gmra.mxu0 %v667
    %v703 = vpop.f32.mrf.mxu0
    %v704 = vadd.f32 0.0, %v703
    %v705 = vpop.f32.mrf.mxu0
    %v706 = vpop.f32.mrf.mxu0
    %v707 = vpop.f32.mrf.mxu0
    %708 = vdwg.mxu0
    %v709 = vadd.f32 %v243, %v704
    %v710 = vxor.u32 %v709, 2147483648
    %v711 = vmul.f32 %v710, 1.442695
    %v712 = vpow.pop %v711
    %v713 = vadd.f32 %v712, 1.0
    %v714 = vrcp.pop %v713
    %v715 = vmul.f32 1.0, %v714
    %v716 = vtanh.pop %v709
    %v717 = vmul.f32 %v715, %v649
    %719 = vrot.lane.b32.xlu0 %v716, 64
    %v720 = vpop.permute.xlu0 %719
    %v722 = vmul.f32 %v715, %v720
    %724 = vrot.lane.b32.xlu0 %v722, 32
    %v725 = vpop.permute.xlu0 %724
    %v727 = vadd.f32 %v717, %v725
    %v728 = vtanh.pop %v727
    %730 = vrot.lane.b32.xlu0 %v728, 64
    %v731 = vpop.permute.xlu0 %730
    %v733 = vmul.f32 %v715, %v731
    %v734 = vpack.c.bf16 %v733, %v733
    %v736 = vunpack.c.l.b16 %v734
    %v737 = vpack.c.b16 %v736, %v736
    %738 = vrot.lane.b32.xlu0 %v737, 32
    %v739 = vpop.permute.xlu0 %738
    %741 = vst.msk [vmem:[%s9 + $0x14] sm:$0xf] %vm350, %v739
    %742 = vrot.lane.b32.xlu0 %v734, 32
    %v743 = vpop.permute.xlu0 %742
    %v745 = vsel %vm176, %v743, 0
    %747 = vmatprep.subr.bf16.mxu0 0
    %748 = vmatpush1.bf16.msra.mxu0 0
    %749 = vmatprep.subr.bf16.mxu0 0
    %750 = vmatpush1.bf16.msra.mxu0 0
    %751 = vmatprep.subr.bf16.mxu0 0
    %752 = vmatpush1.bf16.msra.mxu0 0
    %753 = vmatprep.subr.bf16.mxu0 0
    %754 = vmatpush1.bf16.msra.mxu0 0
    %755 = vmatprep.subr.bf16.mxu0 0
    %756 = vmatpush1.bf16.msra.mxu0 0
    %757 = vmatprep.subr.bf16.mxu0 0
    %758 = vmatpush1.bf16.msra.mxu0 0
    %759 = vmatprep.subr.bf16.mxu0 0
    %760 = vmatpush1.bf16.msra.mxu0 %v268
    %761 = vmatprep.subr.bf16.mxu0 0
    %762 = vmatpush1.bf16.msra.mxu0 %v267
    %763 = vmatprep.subr.bf16.mxu0 0
    %764 = vmatpush2.bf16.msra.mxu0 0
    %765 = vmatprep.subr.bf16.mxu0 0
    %766 = vmatpush2.bf16.msra.mxu0 0
    %767 = vmatprep.subr.bf16.mxu0 0
    %768 = vmatpush2.bf16.msra.mxu0 0
    %769 = vmatprep.subr.bf16.mxu0 0
    %770 = vmatpush2.bf16.msra.mxu0 0
    %771 = vmatprep.subr.bf16.mxu0 0
    %772 = vmatpush2.bf16.msra.mxu0 0
    %773 = vmatprep.subr.bf16.mxu0 0
    %774 = vmatpush2.bf16.msra.mxu0 0
    %775 = vmatprep.subr.bf16.mxu0 0
    %776 = vmatpush2.bf16.msra.mxu0 0
    %777 = vmatprep.subr.bf16.mxu0 0
    %778 = vmatpush2.bf16.msra.mxu0 0
    %779 = vmatprep.mubr.bf16.mxu0 0
    %780 = vmatmul.mubr.bf16.gmra.mxu0 %v745
    %v781 = vpop.f32.mrf.mxu0
    %v782 = vadd.f32 0.0, %v781
    %v783 = vpop.f32.mrf.mxu0
    %v784 = vpop.f32.mrf.mxu0
    %v785 = vpop.f32.mrf.mxu0
    %786 = vdwg.mxu0
    %v787 = vadd.f32 %v248, %v782
    %v788 = vxor.u32 %v787, 2147483648
    %v789 = vmul.f32 %v788, 1.442695
    %v790 = vpow.pop %v789
    %v791 = vadd.f32 %v790, 1.0
    %v792 = vrcp.pop %v791
    %v793 = vmul.f32 1.0, %v792
    %v794 = vtanh.pop %v787
    %v795 = vmul.f32 %v793, %v727
    %797 = vrot.lane.b32.xlu0 %v794, 64
    %v798 = vpop.permute.xlu0 %797
    %v800 = vmul.f32 %v793, %v798
    %802 = vrot.lane.b32.xlu0 %v800, 32
    %v803 = vpop.permute.xlu0 %802
    %v805 = vadd.f32 %v795, %v803
    %v806 = vtanh.pop %v805
    %808 = vrot.lane.b32.xlu0 %v806, 64
    %v809 = vpop.permute.xlu0 %808
    %v811 = vmul.f32 %v793, %v809
    %v812 = vpack.c.bf16 %v811, %v811
    %v814 = vunpack.c.l.b16 %v812
    %v815 = vpack.c.b16 %v814, %v814
    %816 = vrot.lane.b32.xlu0 %v815, 32
    %v817 = vpop.permute.xlu0 %816
    %819 = vst.msk [vmem:[%s9 + $0x18] sm:$0xf] %vm350, %v817
    %820 = vrot.lane.b32.xlu0 %v812, 32
    %v821 = vpop.permute.xlu0 %820
    %v823 = vsel %vm176, %v821, 0
    %825 = vmatprep.subr.bf16.mxu0 0
    %826 = vmatpush1.bf16.msra.mxu0 0
    %827 = vmatprep.subr.bf16.mxu0 0
    %828 = vmatpush1.bf16.msra.mxu0 0
    %829 = vmatprep.subr.bf16.mxu0 0
    %830 = vmatpush1.bf16.msra.mxu0 0
    %831 = vmatprep.subr.bf16.mxu0 0
    %832 = vmatpush1.bf16.msra.mxu0 0
    %833 = vmatprep.subr.bf16.mxu0 0
    %834 = vmatpush1.bf16.msra.mxu0 0
    %835 = vmatprep.subr.bf16.mxu0 0
    %836 = vmatpush1.bf16.msra.mxu0 0
    %837 = vmatprep.subr.bf16.mxu0 0
    %838 = vmatpush1.bf16.msra.mxu0 %v268
    %839 = vmatprep.subr.bf16.mxu0 0
    %840 = vmatpush1.bf16.msra.mxu0 %v267
    %841 = vmatprep.subr.bf16.mxu0 0
    %842 = vmatpush2.bf16.msra.mxu0 0
    %843 = vmatprep.subr.bf16.mxu0 0
    %844 = vmatpush2.bf16.msra.mxu0 0
    %845 = vmatprep.subr.bf16.mxu0 0
    %846 = vmatpush2.bf16.msra.mxu0 0
    %847 = vmatprep.subr.bf16.mxu0 0
    %848 = vmatpush2.bf16.msra.mxu0 0
    %849 = vmatprep.subr.bf16.mxu0 0
    %850 = vmatpush2.bf16.msra.mxu0 0
    %851 = vmatprep.subr.bf16.mxu0 0
    %852 = vmatpush2.bf16.msra.mxu0 0
    %853 = vmatprep.subr.bf16.mxu0 0
    %854 = vmatpush2.bf16.msra.mxu0 0
    %855 = vmatprep.subr.bf16.mxu0 0
    %856 = vmatpush2.bf16.msra.mxu0 0
    %857 = vmatprep.mubr.bf16.mxu0 0
    %858 = vmatmul.mubr.bf16.gmra.mxu0 %v823
    %v859 = vpop.f32.mrf.mxu0
    %v860 = vadd.f32 0.0, %v859
    %v861 = vpop.f32.mrf.mxu0
    %v862 = vpop.f32.mrf.mxu0
    %v863 = vpop.f32.mrf.mxu0
    %864 = vdwg.mxu0
    %v865 = vadd.f32 %v251, %v860
    %v866 = vxor.u32 %v865, 2147483648
    %v867 = vmul.f32 %v866, 1.442695
    %v868 = vpow.pop %v867
    %v869 = vadd.f32 %v868, 1.0
    %v870 = vrcp.pop %v869
    %v871 = vmul.f32 1.0, %v870
    %v872 = vtanh.pop %v865
    %v873 = vmul.f32 %v871, %v805
    %875 = vrot.lane.b32.xlu0 %v872, 64
    %v876 = vpop.permute.xlu0 %875
    %v878 = vmul.f32 %v871, %v876
    %880 = vrot.lane.b32.xlu0 %v878, 32
    %v881 = vpop.permute.xlu0 %880
    %v883 = vadd.f32 %v873, %v881
    %v884 = vtanh.pop %v883
    %886 = vrot.lane.b32.xlu0 %v884, 64
    %v887 = vpop.permute.xlu0 %886
    %v889 = vmul.f32 %v871, %v887
    %v890 = vpack.c.bf16 %v889, %v889
    %v892 = vunpack.c.l.b16 %v890
    %v893 = vpack.c.b16 %v892, %v892
    %894 = vrot.lane.b32.xlu0 %v893, 32
    %v895 = vpop.permute.xlu0 %894
    %897 = vst.msk [vmem:[%s9 + $0x1c] sm:$0xf] %vm350, %v895
    %899 = vrot.lane.b32.xlu0 %v889, 32
    %v900 = vpop.permute.xlu0 %899
    %902 = vst.msk [vmem:[#allocation2] sm:$0xff] %vm176, %v900
    %904 = vrot.lane.b32.xlu0 %v883, 96
    %v905 = vpop.permute.xlu0 %904
    %907 = vst.msk [vmem:[#allocation4] sm:$0xff] %vm176, %v905
    // Predicated region
    $region38: #{decoder_lstm_forward.2} parent=1 // pred_check
      _
    $region39: #{decoder_lstm_forward.2} parent=1 // pred_check_branch
      %909 = sbr.rel (0) target = $region41
    $region40: #{decoder_lstm_forward.2} parent=1 // pred_region
      _
    $region41: #{decoder_lstm_forward.2} parent=1 // pred_fallthru
      _
    // Predicated region
    $region42: #{decoder_lstm_forward.2} parent=1 // pred_check
      _
    $region43: #{decoder_lstm_forward.2} parent=1 // pred_check_branch
      %911 = sbr.rel (0) target = $region45
    $region44: #{decoder_lstm_forward.2} parent=1 // pred_region
      %s913 = ssub.s32 128, 128
      %914 = vsyncadd [#allocation3], %s913
      %s916 = sshll.u32 [#allocation2], 4
      %s917 = int_to_ptr.vmem [resolvable:$true] %s916
      %919 = dma.vmem_to_hbm [thread:$0]  %s917, 128, %s10, [#allocation3]
    $region45: #{decoder_lstm_forward.2} parent=1 // pred_fallthru
      _
    // Predicated region
    $region46: #{decoder_lstm_forward.2} parent=1 // pred_check
      _
    $region47: #{decoder_lstm_forward.2} parent=1 // pred_check_branch
      %921 = sbr.rel (0) target = $region49
    $region48: #{decoder_lstm_forward.2} parent=1 // pred_region
      %s923 = ssub.s32 128, 128
      %924 = vsyncadd [#allocation5], %s923
      %s926 = sshll.u32 [#allocation4], 4
      %s927 = int_to_ptr.vmem [resolvable:$true] %s926
      %929 = dma.vmem_to_hbm [thread:$0]  %s927, 128, %s11, [#allocation5]
    $region49: #{decoder_lstm_forward.2} parent=1 // pred_fallthru
      _
    // Predicated region
    $region50: #{decoder_lstm_forward.2} parent=1 // pred_check
      _
    $region51: #{decoder_lstm_forward.2} parent=1 // pred_check_branch
      %931 = sbr.rel (0) target = $region53
    $region52: #{decoder_lstm_forward.2} parent=1 // pred_region
      _
    $region53: #{decoder_lstm_forward.2} parent=1 // pred_fallthru
      _
    // Predicated region
    $region54: #{decoder_lstm_forward.2} parent=1 // pred_check
      _
    $region55: #{decoder_lstm_forward.2} parent=1 // pred_check_branch
      %933 = sbr.rel (0) target = $region57
    $region56: #{decoder_lstm_forward.2} parent=1 // pred_region
      %934 = dma.done [#allocation3], 128
    $region57: #{decoder_lstm_forward.2} parent=1 // pred_fallthru
      _
    // Predicated region
    $region58: #{decoder_lstm_forward.2} parent=1 // pred_check
      _
    $region59: #{decoder_lstm_forward.2} parent=1 // pred_check_branch
      %936 = sbr.rel (0) target = $region61
    $region60: #{decoder_lstm_forward.2} parent=1 // pred_region
      %937 = dma.done [#allocation5], 128
    $region61: #{decoder_lstm_forward.2} parent=1 // pred_fallthru
      _
    %938 = vsyncpa [#allocation3], 1
    %939 = vsyncpa [#allocation5], 1

</llo_original>
